<compile_context>
chip_gen: v6e
topology: v6e:2x2x1
jax: 0.10.0
libtpu: 0.0.40
codegen_flags: <defaults>
</compile_context>

<pallas_src>
import functools

import jax
import jax.numpy as jnp
import numpy as np
from jax import lax
from jax.experimental import pallas as pl
from jax.experimental.pallas import tpu as pltpu


def _decoder_kernel(x0_ref, h0_ref, w_gates_ref, b_gates_ref, w_lin_ref,
                    b_lin_ref, out_ref, h_final_ref, *,
                    input_size, hidden_size, batch_block, target_seq_len,
                    residual, unroll):
    I, H, B = input_size, hidden_size, batch_block

    # Hoisted bias broadcasts (JAX does not CSE broadcast_in_dim; inside the
    # loop they would be re-emitted every iteration).
    b_gates = jnp.broadcast_to(b_gates_ref[...], (B, 4 * H))  # [r|z|gi_n|gh_n]
    b_lin = jnp.broadcast_to(b_lin_ref[...], (B, I))

    # Initial carry: frame + hidden state live in the loop carry (registers),
    # no VMEM scratch on the serial dependency chain.
    x0 = x0_ref[...]
    h0 = h0_ref[...]
    xh0_bf = jnp.concatenate(
        [x0.astype(jnp.bfloat16), h0.astype(jnp.bfloat16)], axis=-1)

    def step_body(step, carry):
        x, h, xh_bf = carry

        # ONE fused gate matmul per step: (B, I+H) @ (I+H, 4H), f32 accumulate.
        # Column blocks: r-preact | z-preact | gi_n (x part) | gh_n (h part).
        s = jnp.dot(xh_bf, w_gates_ref[...],
                    preferred_element_type=jnp.float32) + b_gates
        r = jax.nn.sigmoid(s[:, :H])
        z = jax.nn.sigmoid(s[:, H:2 * H])
        n = jnp.tanh(s[:, 2 * H:3 * H] + r * s[:, 3 * H:])
        h_new = (1.0 - z) * n + z * h
        h_new_bf = h_new.astype(jnp.bfloat16)        # bf16 at creation point

        # Linear head (+ optional residual onto the previous frame).
        y = jnp.dot(h_new_bf, w_lin_ref[...],
                    preferred_element_type=jnp.float32) + b_lin
        if residual:
            y = y + x                                # output_size == input_size

        out_ref[pl.ds(step, 1)] = y[None]            # outputs[step] = new frame
        xh_next_bf = jnp.concatenate([y.astype(jnp.bfloat16), h_new_bf],
                                     axis=-1)
        return (y, h_new, xh_next_bf)

    _, h_last, _ = lax.fori_loop(0, target_seq_len, step_body,
                                 (x0, h0, xh0_bf), unroll=unroll)

    # Final hidden state written once, after the decode loop.
    h_final_ref[...] = h_last


def decoder_wrapper_forward(inputs, state, target_seq_len, packed_params, *,
                            residual=True):
    """inputs: (1, B, I) f32; state: (1, B, H) f32. Returns (outputs, state)."""
    T, B, I = inputs.shape
    assert T == 1, "autoregressive decode requires time_seq_len == 1 (see torch code)"
    _, _, H = state.shape
    w_gates, b_gates, w_lin, b_lin = packed_params

    # Batch block-split: independent decode streams, so splitting the batch
    # across a "parallel" grid axis is legal; on v7x (2 TCs/chip) this uses the
    # second TensorCore. Keep each block sublane-aligned (multiple of 8).
    if B >= 16 and (B // 2) % 8 == 0:
        bb = B // 2
    else:
        bb = B
    nb = B // bb

    kernel = functools.partial(
        _decoder_kernel, input_size=I, hidden_size=H, batch_block=bb,
        target_seq_len=target_seq_len, residual=residual,
        unroll=int(min(max(target_seq_len, 1), 8)))

    out, h_final = pl.pallas_call(
        kernel,
        out_shape=(jax.ShapeDtypeStruct((target_seq_len, B, I), jnp.float32),
                   jax.ShapeDtypeStruct((B, H), jnp.float32)),
        grid_spec=pltpu.PrefetchScalarGridSpec(
            num_scalar_prefetch=0,
            grid=(nb,),                                       # batch blocks; decode loop is in-kernel
            in_specs=[
                pl.BlockSpec((bb, I), lambda i: (i, 0)),          # x0 block
                pl.BlockSpec((bb, H), lambda i: (i, 0)),          # h0 block
                pl.BlockSpec((I + H, 4 * H), lambda i: (0, 0)),   # fused gate weight (bf16)
                pl.BlockSpec((1, 4 * H), lambda i: (0, 0)),       # gate bias [r|z|gi_n|gh_n]
                pl.BlockSpec((H, I), lambda i: (0, 0)),           # W_lin^T (bf16)
                pl.BlockSpec((1, I), lambda i: (0, 0)),           # b_lin
            ],
            out_specs=(
                pl.BlockSpec((target_seq_len, bb, I), lambda i: (0, i, 0)),  # outputs
                pl.BlockSpec((bb, H), lambda i: (i, 0)),                     # final state
            ),
        ),
        # NOTE: at these sizes everything fits the default scoped-VMEM limit.
        # For much larger H (esp. v7x 64 MiB VMEM) set vmem_limit_bytes and
        # put pipeline_mode=pl.Buffered(1) on the weight BlockSpecs to drop
        # the pointless double-buffering of constant weights.
        compiler_params=pltpu.CompilerParams(
            dimension_semantics=("parallel",)),
    )(inputs[0], state[0], w_gates, b_gates, w_lin, b_lin)

    return out, h_final[None]  # state back as (1, B, H) like nn.GRU


def _pack_params(raw_params):
    """Torch-layout GRU/Linear params -> fused kernel layout.

    Builds one (I+H, 4H) bf16 gate matrix with column blocks
    [r | z | gi_n | gh_n]:
      rows 0:I   (x rows): [W_ir^T W_iz^T | W_in^T | 0     ]
      rows I:I+H (h rows): [W_hr^T W_hz^T | 0      | W_hn^T]
    and the matching (1, 4H) bias [b_ir+b_hr | b_iz+b_hz | b_in | b_hn].
    """
    w_ih, w_hh, b_ih, b_hh, w_lin, b_lin = raw_params
    H = w_hh.shape[1]
    I = w_ih.shape[1]
    w_ih_t = w_ih.T   # (I, 3H)
    w_hh_t = w_hh.T   # (H, 3H)
    top = jnp.concatenate(
        [w_ih_t[:, :2 * H], w_ih_t[:, 2 * H:], jnp.zeros((I, H), w_ih.dtype)],
        axis=1)
    bot = jnp.concatenate(
        [w_hh_t[:, :2 * H], jnp.zeros((H, H), w_hh.dtype), w_hh_t[:, 2 * H:]],
        axis=1)
    w_gates = jnp.concatenate([top, bot], axis=0).astype(jnp.bfloat16)  # (I+H, 4H)
    b_gates = jnp.concatenate(
        [b_ih[:, :2 * H] + b_hh[:, :2 * H], b_ih[:, 2 * H:], b_hh[:, 2 * H:]],
        axis=1).astype(jnp.float32)                                     # (1, 4H)
    return (w_gates, b_gates,
            w_lin.T.astype(jnp.bfloat16),                               # (H, I)
            b_lin.astype(jnp.float32))                                  # (1, I)


def _reference_forward(inputs, state, target_seq_len, raw_params, *, residual=True):
    """Pure-JAX f32 reference reproducing the PyTorch semantics exactly."""
    w_ih, w_hh, b_ih, b_hh, w_lin, b_lin = raw_params
    H = w_hh.shape[1]
    x = inputs[0]
    h = state[0]
    outs = []
    for _ in range(target_seq_len):
        gi = x @ w_ih.T + b_ih
        gh = h @ w_hh.T + b_hh
        r = jax.nn.sigmoid(gi[:, :H] + gh[:, :H])
        z = jax.nn.sigmoid(gi[:, H:2 * H] + gh[:, H:2 * H])
        n = jnp.tanh(gi[:, 2 * H:] + r * gh[:, 2 * H:])
        h = (1.0 - z) * n + z * h
        y = h @ w_lin.T + b_lin
        if residual:
            y = y + x
        outs.append(y)
        x = y
    return jnp.stack(outs, axis=0), h[None]


def _init_params(key, input_size, hidden_size, output_size):
    """Deterministic init matching torch defaults (+ uniform(-.04,.04) linear weight)."""
    ks = jax.random.split(key, 6)
    bound = 1.0 / np.sqrt(hidden_size)
    w_ih = jax.random.uniform(ks[0], (3 * hidden_size, input_size), jnp.float32, -bound, bound)
    w_hh = jax.random.uniform(ks[1], (3 * hidden_size, hidden_size), jnp.float32, -bound, bound)
    b_ih = jax.random.uniform(ks[2], (1, 3 * hidden_size), jnp.float32, -bound, bound)
    b_hh = jax.random.uniform(ks[3], (1, 3 * hidden_size), jnp.float32, -bound, bound)
    w_lin = jax.random.uniform(ks[4], (output_size, hidden_size), jnp.float32, -0.04, 0.04)
    b_lin = jax.random.uniform(ks[5], (1, output_size), jnp.float32, -bound, bound)
    return (w_ih, w_hh, b_ih, b_hh, w_lin, b_lin)


if __name__ == "__main__":
    I = 128            # input_size == output_size (lane-aligned)
    H = 128            # hidden_size
    TARGET_SEQ_LEN = 4

    key = jax.random.PRNGKey(0)
    kp, kdata = jax.random.split(key)
    raw_params = _init_params(kp, I, H, I)
    packed_params = _pack_params(raw_params)

    # (batch, residual) cases: B=8 (single grid block), B=16 (batch split ->
    # 2 grid blocks, exercises the v7x dual-TC path), residual off.
    for B, residual in ((8, True), (16, True), (8, False)):
        kx, kh = jax.random.split(jax.random.fold_in(kdata, 17 * B + int(residual)))
        inputs = jax.random.normal(kx, (1, B, I), jnp.float32)   # (time=1, batch, feature)
        state = jax.random.normal(kh, (1, B, H), jnp.float32)    # (layers=1, batch, hidden)

        ref_out, ref_state = _reference_forward(
            inputs, state, TARGET_SEQ_LEN, raw_params, residual=residual)

        outputs, final_state = decoder_wrapper_forward(
            inputs, state, TARGET_SEQ_LEN, packed_params, residual=residual)
        outputs = jax.block_until_ready(outputs)
        final_state = jax.block_until_ready(final_state)

        # bf16 matmul operands (f32 accumulation) -> relaxed tolerance.
        np.testing.assert_allclose(np.asarray(outputs), np.asarray(ref_out),
                                   rtol=3e-2, atol=3e-2)
        np.testing.assert_allclose(np.asarray(final_state), np.asarray(ref_state),
                                   rtol=3e-2, atol=3e-2)

    print("KERNEL_OK")
</pallas_src>

<mosaic_0001>
module attributes {stable_mosaic.version = 11 : i64} {
  func.func @_decoder_kernel(%arg0: i32, %arg1: memref<8x128xf32, #tpu.memory_space<vmem>>, %arg2: memref<8x128xf32, #tpu.memory_space<vmem>>, %arg3: memref<256x512xbf16, #tpu.memory_space<vmem>>, %arg4: memref<1x512xf32, #tpu.memory_space<vmem>>, %arg5: memref<128x128xbf16, #tpu.memory_space<vmem>>, %arg6: memref<1x128xf32, #tpu.memory_space<vmem>>, %arg7: memref<4x8x128xf32, #tpu.memory_space<vmem>>, %arg8: memref<8x128xf32, #tpu.memory_space<vmem>>) attributes {dimension_semantics = [#tpu.dimension_semantics<parallel>], iteration_bounds = array<i64: 1>, scalar_prefetch = 0 : i64, scratch_operands = 0 : i64, tpu.core_type = #tpu.core_type<tc>, window_params = [{transform_indices = @transform_0, window_bounds = array<i64: 8, 128>}, {transform_indices = @transform_1, window_bounds = array<i64: 8, 128>}, {pipeline_mode = #tpu.pipeline_mode<synchronous>, transform_indices = @transform_2, window_bounds = array<i64: 256, 512>}, {pipeline_mode = #tpu.pipeline_mode<synchronous>, transform_indices = @transform_3, window_bounds = array<i64: 1, 512>}, {pipeline_mode = #tpu.pipeline_mode<synchronous>, transform_indices = @transform_4, window_bounds = array<i64: 128, 128>}, {pipeline_mode = #tpu.pipeline_mode<synchronous>, transform_indices = @transform_5, window_bounds = array<i64: 1, 128>}, {transform_indices = @transform_6, window_bounds = array<i64: 4, 8, 128>}, {transform_indices = @transform_7, window_bounds = array<i64: 8, 128>}]} {
    %c0 = arith.constant 0 : index
    %c0_0 = arith.constant 0 : index
    %0 = vector.load %arg4[%c0, %c0_0] : memref<1x512xf32, #tpu.memory_space<vmem>>, vector<1x512xf32>
    %1 = vector.shape_cast %0 : vector<1x512xf32> to vector<1x512xf32>
    %2 = vector.broadcast %1 : vector<1x512xf32> to vector<8x512xf32>
    %c0_1 = arith.constant 0 : index
    %c0_2 = arith.constant 0 : index
    %3 = vector.load %arg6[%c0_1, %c0_2] : memref<1x128xf32, #tpu.memory_space<vmem>>, vector<1x128xf32>
    %4 = vector.shape_cast %3 : vector<1x128xf32> to vector<1x128xf32>
    %5 = vector.broadcast %4 : vector<1x128xf32> to vector<8x128xf32>
    %c0_3 = arith.constant 0 : index
    %c0_4 = arith.constant 0 : index
    %6 = vector.load %arg1[%c0_3, %c0_4] : memref<8x128xf32, #tpu.memory_space<vmem>>, vector<8x128xf32>
    %c0_5 = arith.constant 0 : index
    %c0_6 = arith.constant 0 : index
    %7 = vector.load %arg2[%c0_5, %c0_6] : memref<8x128xf32, #tpu.memory_space<vmem>>, vector<8x128xf32>
    %8 = arith.truncf %6 : vector<8x128xf32> to vector<8x128xbf16>
    %9 = arith.truncf %7 : vector<8x128xf32> to vector<8x128xbf16>
    %10 = tpu.concatenate %8, %9 in 1 : vector<8x128xbf16>, vector<8x128xbf16> -> vector<8x256xbf16>
    %c0_i32 = arith.constant 0 : i32
    %c0_7 = arith.constant 0 : index
    %c0_8 = arith.constant 0 : index
    %11 = vector.load %arg3[%c0_7, %c0_8] : memref<256x512xbf16, #tpu.memory_space<vmem>>, vector<256x512xbf16>
    %cst = arith.constant dense<0.000000e+00> : vector<8x512xf32>
    %12 = tpu.matmul %10, %11, %cst {dimension_numbers = #tpu.dot_dimension_numbers<[1], [0], [0], [1], [0, 0, 1, 1], [], []>} : vector<8x256xbf16>, vector<256x512xbf16>, vector<8x512xf32> -> vector<8x512xf32>
    %13 = arith.addf %12, %2 : vector<8x512xf32>
    %14 = vector.extract_strided_slice %13 {offsets = [0, 0], sizes = [8, 128], strides = [1, 1]} : vector<8x512xf32> to vector<8x128xf32>
    %15 = arith.negf %14 : vector<8x128xf32>
    %16 = math.exp %15 : vector<8x128xf32>
    %cst_9 = arith.constant 1.000000e+00 : f32
    %17 = vector.broadcast %cst_9 : f32 to vector<8x128xf32>
    %18 = arith.addf %17, %16 : vector<8x128xf32>
    %19 = arith.divf %17, %18 : vector<8x128xf32>
    %20 = vector.extract_strided_slice %13 {offsets = [0, 128], sizes = [8, 128], strides = [1, 1]} : vector<8x512xf32> to vector<8x128xf32>
    %21 = arith.negf %20 : vector<8x128xf32>
    %22 = math.exp %21 : vector<8x128xf32>
    %cst_10 = arith.constant 1.000000e+00 : f32
    %23 = vector.broadcast %cst_10 : f32 to vector<8x128xf32>
    %24 = arith.addf %23, %22 : vector<8x128xf32>
    %25 = arith.divf %23, %24 : vector<8x128xf32>
    %26 = vector.extract_strided_slice %13 {offsets = [0, 256], sizes = [8, 128], strides = [1, 1]} : vector<8x512xf32> to vector<8x128xf32>
    %27 = vector.extract_strided_slice %13 {offsets = [0, 384], sizes = [8, 128], strides = [1, 1]} : vector<8x512xf32> to vector<8x128xf32>
    %28 = arith.mulf %19, %27 : vector<8x128xf32>
    %29 = arith.addf %26, %28 : vector<8x128xf32>
    %30 = math.tanh %29 : vector<8x128xf32>
    %cst_11 = arith.constant 1.000000e+00 : f32
    %31 = vector.broadcast %cst_11 : f32 to vector<8x128xf32>
    %32 = arith.subf %31, %25 : vector<8x128xf32>
    %33 = arith.mulf %32, %30 : vector<8x128xf32>
    %34 = arith.mulf %25, %7 : vector<8x128xf32>
    %35 = arith.addf %33, %34 : vector<8x128xf32>
    %36 = arith.truncf %35 : vector<8x128xf32> to vector<8x128xbf16>
    %c0_12 = arith.constant 0 : index
    %c0_13 = arith.constant 0 : index
    %37 = vector.load %arg5[%c0_12, %c0_13] : memref<128x128xbf16, #tpu.memory_space<vmem>>, vector<128x128xbf16>
    %cst_14 = arith.constant dense<0.000000e+00> : vector<8x128xf32>
    %38 = tpu.matmul %36, %37, %cst_14 {dimension_numbers = #tpu.dot_dimension_numbers<[1], [0], [0], [1], [0, 0, 1, 1], [], []>} : vector<8x128xbf16>, vector<128x128xbf16>, vector<8x128xf32> -> vector<8x128xf32>
    %39 = arith.addf %38, %5 : vector<8x128xf32>
    %40 = arith.addf %39, %6 : vector<8x128xf32>
    %41 = vector.shape_cast %40 : vector<8x128xf32> to vector<1x8x128xf32>
    %42 = arith.index_cast %c0_i32 : i32 to index
    %c0_15 = arith.constant 0 : index
    %c0_16 = arith.constant 0 : index
    %43 = vector.load %arg7[%42, %c0_15, %c0_16] : memref<4x8x128xf32, #tpu.memory_space<vmem>>, vector<1x8x128xf32>
    tpu.vector_store %arg7[%42, %c0_15, %c0_16], %41 {strides = array<i32>} : memref<4x8x128xf32, #tpu.memory_space<vmem>>, vector<1x8x128xf32>,
    %44 = arith.truncf %40 : vector<8x128xf32> to vector<8x128xbf16>
    %45 = tpu.concatenate %44, %36 in 1 : vector<8x128xbf16>, vector<8x128xbf16> -> vector<8x256xbf16>
    %c1_i32 = arith.constant 1 : i32
    %c0_17 = arith.constant 0 : index
    %c0_18 = arith.constant 0 : index
    %46 = vector.load %arg3[%c0_17, %c0_18] : memref<256x512xbf16, #tpu.memory_space<vmem>>, vector<256x512xbf16>
    %cst_19 = arith.constant dense<0.000000e+00> : vector<8x512xf32>
    %47 = tpu.matmul %45, %46, %cst_19 {dimension_numbers = #tpu.dot_dimension_numbers<[1], [0], [0], [1], [0, 0, 1, 1], [], []>} : vector<8x256xbf16>, vector<256x512xbf16>, vector<8x512xf32> -> vector<8x512xf32>
    %48 = arith.addf %47, %2 : vector<8x512xf32>
    %49 = vector.extract_strided_slice %48 {offsets = [0, 0], sizes = [8, 128], strides = [1, 1]} : vector<8x512xf32> to vector<8x128xf32>
    %50 = arith.negf %49 : vector<8x128xf32>
    %51 = math.exp %50 : vector<8x128xf32>
    %cst_20 = arith.constant 1.000000e+00 : f32
    %52 = vector.broadcast %cst_20 : f32 to vector<8x128xf32>
    %53 = arith.addf %52, %51 : vector<8x128xf32>
    %54 = arith.divf %52, %53 : vector<8x128xf32>
    %55 = vector.extract_strided_slice %48 {offsets = [0, 128], sizes = [8, 128], strides = [1, 1]} : vector<8x512xf32> to vector<8x128xf32>
    %56 = arith.negf %55 : vector<8x128xf32>
    %57 = math.exp %56 : vector<8x128xf32>
    %cst_21 = arith.constant 1.000000e+00 : f32
    %58 = vector.broadcast %cst_21 : f32 to vector<8x128xf32>
    %59 = arith.addf %58, %57 : vector<8x128xf32>
    %60 = arith.divf %58, %59 : vector<8x128xf32>
    %61 = vector.extract_strided_slice %48 {offsets = [0, 256], sizes = [8, 128], strides = [1, 1]} : vector<8x512xf32> to vector<8x128xf32>
    %62 = vector.extract_strided_slice %48 {offsets = [0, 384], sizes = [8, 128], strides = [1, 1]} : vector<8x512xf32> to vector<8x128xf32>
    %63 = arith.mulf %54, %62 : vector<8x128xf32>
    %64 = arith.addf %61, %63 : vector<8x128xf32>
    %65 = math.tanh %64 : vector<8x128xf32>
    %cst_22 = arith.constant 1.000000e+00 : f32
    %66 = vector.broadcast %cst_22 : f32 to vector<8x128xf32>
    %67 = arith.subf %66, %60 : vector<8x128xf32>
    %68 = arith.mulf %67, %65 : vector<8x128xf32>
    %69 = arith.mulf %60, %35 : vector<8x128xf32>
    %70 = arith.addf %68, %69 : vector<8x128xf32>
    %71 = arith.truncf %70 : vector<8x128xf32> to vector<8x128xbf16>
    %c0_23 = arith.constant 0 : index
    %c0_24 = arith.constant 0 : index
    %72 = vector.load %arg5[%c0_23, %c0_24] : memref<128x128xbf16, #tpu.memory_space<vmem>>, vector<128x128xbf16>
    %cst_25 = arith.constant dense<0.000000e+00> : vector<8x128xf32>
    %73 = tpu.matmul %71, %72, %cst_25 {dimension_numbers = #tpu.dot_dimension_numbers<[1], [0], [0], [1], [0, 0, 1, 1], [], []>} : vector<8x128xbf16>, vector<128x128xbf16>, vector<8x128xf32> -> vector<8x128xf32>
    %74 = arith.addf %73, %5 : vector<8x128xf32>
    %75 = arith.addf %74, %40 : vector<8x128xf32>
    %76 = vector.shape_cast %75 : vector<8x128xf32> to vector<1x8x128xf32>
    %77 = arith.index_cast %c1_i32 : i32 to index
    %c0_26 = arith.constant 0 : index
    %c0_27 = arith.constant 0 : index
    %78 = vector.load %arg7[%77, %c0_26, %c0_27] : memref<4x8x128xf32, #tpu.memory_space<vmem>>, vector<1x8x128xf32>
    tpu.vector_store %arg7[%77, %c0_26, %c0_27], %76 {strides = array<i32>} : memref<4x8x128xf32, #tpu.memory_space<vmem>>, vector<1x8x128xf32>,
    %79 = arith.truncf %75 : vector<8x128xf32> to vector<8x128xbf16>
    %80 = tpu.concatenate %79, %71 in 1 : vector<8x128xbf16>, vector<8x128xbf16> -> vector<8x256xbf16>
    %c2_i32 = arith.constant 2 : i32
    %c0_28 = arith.constant 0 : index
    %c0_29 = arith.constant 0 : index
    %81 = vector.load %arg3[%c0_28, %c0_29] : memref<256x512xbf16, #tpu.memory_space<vmem>>, vector<256x512xbf16>
    %cst_30 = arith.constant dense<0.000000e+00> : vector<8x512xf32>
    %82 = tpu.matmul %80, %81, %cst_30 {dimension_numbers = #tpu.dot_dimension_numbers<[1], [0], [0], [1], [0, 0, 1, 1], [], []>} : vector<8x256xbf16>, vector<256x512xbf16>, vector<8x512xf32> -> vector<8x512xf32>
    %83 = arith.addf %82, %2 : vector<8x512xf32>
    %84 = vector.extract_strided_slice %83 {offsets = [0, 0], sizes = [8, 128], strides = [1, 1]} : vector<8x512xf32> to vector<8x128xf32>
    %85 = arith.negf %84 : vector<8x128xf32>
    %86 = math.exp %85 : vector<8x128xf32>
    %cst_31 = arith.constant 1.000000e+00 : f32
    %87 = vector.broadcast %cst_31 : f32 to vector<8x128xf32>
    %88 = arith.addf %87, %86 : vector<8x128xf32>
    %89 = arith.divf %87, %88 : vector<8x128xf32>
    %90 = vector.extract_strided_slice %83 {offsets = [0, 128], sizes = [8, 128], strides = [1, 1]} : vector<8x512xf32> to vector<8x128xf32>
    %91 = arith.negf %90 : vector<8x128xf32>
    %92 = math.exp %91 : vector<8x128xf32>
    %cst_32 = arith.constant 1.000000e+00 : f32
    %93 = vector.broadcast %cst_32 : f32 to vector<8x128xf32>
    %94 = arith.addf %93, %92 : vector<8x128xf32>
    %95 = arith.divf %93, %94 : vector<8x128xf32>
    %96 = vector.extract_strided_slice %83 {offsets = [0, 256], sizes = [8, 128], strides = [1, 1]} : vector<8x512xf32> to vector<8x128xf32>
    %97 = vector.extract_strided_slice %83 {offsets = [0, 384], sizes = [8, 128], strides = [1, 1]} : vector<8x512xf32> to vector<8x128xf32>
    %98 = arith.mulf %89, %97 : vector<8x128xf32>
    %99 = arith.addf %96, %98 : vector<8x128xf32>
    %100 = math.tanh %99 : vector<8x128xf32>
    %cst_33 = arith.constant 1.000000e+00 : f32
    %101 = vector.broadcast %cst_33 : f32 to vector<8x128xf32>
    %102 = arith.subf %101, %95 : vector<8x128xf32>
    %103 = arith.mulf %102, %100 : vector<8x128xf32>
    %104 = arith.mulf %95, %70 : vector<8x128xf32>
    %105 = arith.addf %103, %104 : vector<8x128xf32>
    %106 = arith.truncf %105 : vector<8x128xf32> to vector<8x128xbf16>
    %c0_34 = arith.constant 0 : index
    %c0_35 = arith.constant 0 : index
    %107 = vector.load %arg5[%c0_34, %c0_35] : memref<128x128xbf16, #tpu.memory_space<vmem>>, vector<128x128xbf16>
    %cst_36 = arith.constant dense<0.000000e+00> : vector<8x128xf32>
    %108 = tpu.matmul %106, %107, %cst_36 {dimension_numbers = #tpu.dot_dimension_numbers<[1], [0], [0], [1], [0, 0, 1, 1], [], []>} : vector<8x128xbf16>, vector<128x128xbf16>, vector<8x128xf32> -> vector<8x128xf32>
    %109 = arith.addf %108, %5 : vector<8x128xf32>
    %110 = arith.addf %109, %75 : vector<8x128xf32>
    %111 = vector.shape_cast %110 : vector<8x128xf32> to vector<1x8x128xf32>
    %112 = arith.index_cast %c2_i32 : i32 to index
    %c0_37 = arith.constant 0 : index
    %c0_38 = arith.constant 0 : index
    %113 = vector.load %arg7[%112, %c0_37, %c0_38] : memref<4x8x128xf32, #tpu.memory_space<vmem>>, vector<1x8x128xf32>
    tpu.vector_store %arg7[%112, %c0_37, %c0_38], %111 {strides = array<i32>} : memref<4x8x128xf32, #tpu.memory_space<vmem>>, vector<1x8x128xf32>,
    %114 = arith.truncf %110 : vector<8x128xf32> to vector<8x128xbf16>
    %115 = tpu.concatenate %114, %106 in 1 : vector<8x128xbf16>, vector<8x128xbf16> -> vector<8x256xbf16>
    %c3_i32 = arith.constant 3 : i32
    %c0_39 = arith.constant 0 : index
    %c0_40 = arith.constant 0 : index
    %116 = vector.load %arg3[%c0_39, %c0_40] : memref<256x512xbf16, #tpu.memory_space<vmem>>, vector<256x512xbf16>
    %cst_41 = arith.constant dense<0.000000e+00> : vector<8x512xf32>
    %117 = tpu.matmul %115, %116, %cst_41 {dimension_numbers = #tpu.dot_dimension_numbers<[1], [0], [0], [1], [0, 0, 1, 1], [], []>} : vector<8x256xbf16>, vector<256x512xbf16>, vector<8x512xf32> -> vector<8x512xf32>
    %118 = arith.addf %117, %2 : vector<8x512xf32>
    %119 = vector.extract_strided_slice %118 {offsets = [0, 0], sizes = [8, 128], strides = [1, 1]} : vector<8x512xf32> to vector<8x128xf32>
    %120 = arith.negf %119 : vector<8x128xf32>
    %121 = math.exp %120 : vector<8x128xf32>
    %cst_42 = arith.constant 1.000000e+00 : f32
    %122 = vector.broadcast %cst_42 : f32 to vector<8x128xf32>
    %123 = arith.addf %122, %121 : vector<8x128xf32>
    %124 = arith.divf %122, %123 : vector<8x128xf32>
    %125 = vector.extract_strided_slice %118 {offsets = [0, 128], sizes = [8, 128], strides = [1, 1]} : vector<8x512xf32> to vector<8x128xf32>
    %126 = arith.negf %125 : vector<8x128xf32>
    %127 = math.exp %126 : vector<8x128xf32>
    %cst_43 = arith.constant 1.000000e+00 : f32
    %128 = vector.broadcast %cst_43 : f32 to vector<8x128xf32>
    %129 = arith.addf %128, %127 : vector<8x128xf32>
    %130 = arith.divf %128, %129 : vector<8x128xf32>
    %131 = vector.extract_strided_slice %118 {offsets = [0, 256], sizes = [8, 128], strides = [1, 1]} : vector<8x512xf32> to vector<8x128xf32>
    %132 = vector.extract_strided_slice %118 {offsets = [0, 384], sizes = [8, 128], strides = [1, 1]} : vector<8x512xf32> to vector<8x128xf32>
    %133 = arith.mulf %124, %132 : vector<8x128xf32>
    %134 = arith.addf %131, %133 : vector<8x128xf32>
    %135 = math.tanh %134 : vector<8x128xf32>
    %cst_44 = arith.constant 1.000000e+00 : f32
    %136 = vector.broadcast %cst_44 : f32 to vector<8x128xf32>
    %137 = arith.subf %136, %130 : vector<8x128xf32>
    %138 = arith.mulf %137, %135 : vector<8x128xf32>
    %139 = arith.mulf %130, %105 : vector<8x128xf32>
    %140 = arith.addf %138, %139 : vector<8x128xf32>
    %141 = arith.truncf %140 : vector<8x128xf32> to vector<8x128xbf16>
    %c0_45 = arith.constant 0 : index
    %c0_46 = arith.constant 0 : index
    %142 = vector.load %arg5[%c0_45, %c0_46] : memref<128x128xbf16, #tpu.memory_space<vmem>>, vector<128x128xbf16>
    %cst_47 = arith.constant dense<0.000000e+00> : vector<8x128xf32>
    %143 = tpu.matmul %141, %142, %cst_47 {dimension_numbers = #tpu.dot_dimension_numbers<[1], [0], [0], [1], [0, 0, 1, 1], [], []>} : vector<8x128xbf16>, vector<128x128xbf16>, vector<8x128xf32> -> vector<8x128xf32>
    %144 = arith.addf %143, %5 : vector<8x128xf32>
    %145 = arith.addf %144, %110 : vector<8x128xf32>
    %146 = vector.shape_cast %145 : vector<8x128xf32> to vector<1x8x128xf32>
    %147 = arith.index_cast %c3_i32 : i32 to index
    %c0_48 = arith.constant 0 : index
    %c0_49 = arith.constant 0 : index
    %148 = vector.load %arg7[%147, %c0_48, %c0_49] : memref<4x8x128xf32, #tpu.memory_space<vmem>>, vector<1x8x128xf32>
    tpu.vector_store %arg7[%147, %c0_48, %c0_49], %146 {strides = array<i32>} : memref<4x8x128xf32, #tpu.memory_space<vmem>>, vector<1x8x128xf32>,
    %149 = arith.truncf %145 : vector<8x128xf32> to vector<8x128xbf16>
    %150 = tpu.concatenate %149, %141 in 1 : vector<8x128xbf16>, vector<8x128xbf16> -> vector<8x256xbf16>
    %c4_i32 = arith.constant 4 : i32
    %c0_50 = arith.constant 0 : index
    %c0_51 = arith.constant 0 : index
    %151 = vector.load %arg8[%c0_50, %c0_51] : memref<8x128xf32, #tpu.memory_space<vmem>>, vector<8x128xf32>
    tpu.vector_store %arg8[%c0_50, %c0_51], %140 {strides = array<i32>} : memref<8x128xf32, #tpu.memory_space<vmem>>, vector<8x128xf32>,
    return
  }
  func.func @transform_0(%arg0: i32) -> (i32, i32) {
    %c0_i32 = arith.constant 0 : i32
    %c0_i32_0 = arith.constant 0 : i32
    return %arg0, %c0_i32 : i32, i32
  }
  func.func @transform_1(%arg0: i32) -> (i32, i32) {
    %c0_i32 = arith.constant 0 : i32
    %c0_i32_0 = arith.constant 0 : i32
    return %arg0, %c0_i32 : i32, i32
  }
  func.func @transform_2(%arg0: i32) -> (i32, i32) {
    %c0_i32 = arith.constant 0 : i32
    %c0_i32_0 = arith.constant 0 : i32
    %c0_i32_1 = arith.constant 0 : i32
    return %c0_i32, %c0_i32_0 : i32, i32
  }
  func.func @transform_3(%arg0: i32) -> (i32, i32) {
    %c0_i32 = arith.constant 0 : i32
    %c0_i32_0 = arith.constant 0 : i32
    %c0_i32_1 = arith.constant 0 : i32
    return %c0_i32, %c0_i32_0 : i32, i32
  }
  func.func @transform_4(%arg0: i32) -> (i32, i32) {
    %c0_i32 = arith.constant 0 : i32
    %c0_i32_0 = arith.constant 0 : i32
    %c0_i32_1 = arith.constant 0 : i32
    return %c0_i32, %c0_i32_0 : i32, i32
  }
  func.func @transform_5(%arg0: i32) -> (i32, i32) {
    %c0_i32 = arith.constant 0 : i32
    %c0_i32_0 = arith.constant 0 : i32
    %c0_i32_1 = arith.constant 0 : i32
    return %c0_i32, %c0_i32_0 : i32, i32
  }
  func.func @transform_6(%arg0: i32) -> (i32, i32, i32) {
    %c0_i32 = arith.constant 0 : i32
    %c0_i32_0 = arith.constant 0 : i32
    %c0_i32_1 = arith.constant 0 : i32
    return %c0_i32, %arg0, %c0_i32_0 : i32, i32, i32
  }
  func.func @transform_7(%arg0: i32) -> (i32, i32) {
    %c0_i32 = arith.constant 0 : i32
    %c0_i32_0 = arith.constant 0 : i32
    return %arg0, %c0_i32 : i32, i32
  }
}

</mosaic_0001>

<llo_original>
// kernel: tpu_custom_call.1
$region0: #{tpu_custom_call.1}
  #allocation0 [shape = 'u32[]', space=smem, size = 0x4, offset = 0x4, fixed_abs, tag = 'smem constant byte address 0x4 - core index']
  #allocation1 [shape = 'u32[144,128]{1,0:T(1,128)}', space=vmem, size = 0x12000, scoped, tag = 'internal scratch']
  %s0 = inlined_call_operand.hbm [shape: f32[8,128], index: 0, kind: input, shape index: {}]
  %s1 = inlined_call_operand.hbm [shape: f32[8,128], index: 1, kind: input, shape index: {}]
  %s2 = inlined_call_operand.hbm [shape: bf16[256,512], index: 2, kind: input, shape index: {}]
  %s3 = inlined_call_operand.vmem [shape: f32[1,512], index: 3, kind: input, shape index: {}]
  %s4 = inlined_call_operand.hbm [shape: bf16[128,128], index: 4, kind: input, shape index: {}]
  %s5 = inlined_call_operand.vmem [shape: f32[1,128], index: 5, kind: input, shape index: {}]
  %s6 = inlined_call_operand.hbm [shape: f32[4,8,128], index: 6, kind: output, shape index: {0}]
  %s7 = inlined_call_operand.hbm [shape: f32[8,128], index: 7, kind: output, shape index: {1}]
  %8 = xla_tuple %s6, %s7
  %s9 = sld [smem:[#allocation0]]
  $region58: #{tpu_custom_call.1} parent=0
    _
  %s11 = ssub.s32 1, %s9
  %s12 = scalar_select 0, %s11, %s9
  $region1: #{tpu_custom_call.1} parent=0
    #allocation2 [shape = 'u8[4096]{0}', space=vmem, size = 0x1000, scoped, tag = 'input window, operand 0, single buffered']
    #allocation3 [shape = 's32[1]{0}', space=sflag, size = 0x4, scoped, tag = 'scoped memory for tpu_custom_call.1']
    #allocation4 [shape = 's32[1]{0}', space=sflag, size = 0x4, scoped, tag = 'scoped memory for tpu_custom_call.1']
    #allocation5 [shape = 'u8[4096]{0}', space=vmem, size = 0x1000, scoped, tag = 'input window, operand 1, single buffered']
    #allocation6 [shape = 's32[1]{0}', space=sflag, size = 0x4, scoped, tag = 'scoped memory for tpu_custom_call.1']
    #allocation7 [shape = 'u8[262144]{0}', space=vmem, size = 0x40000, scoped, tag = 'input window, operand 2, single buffered']
    #allocation8 [shape = 'u8[32768]{0}', space=vmem, size = 0x8000, scoped, tag = 'input window, operand 4, single buffered']
    #allocation9 [shape = 's32[1]{0}', space=sflag, size = 0x4, scoped, tag = 'scoped memory for tpu_custom_call.1']
    #allocation10 [shape = 'u8[16384]{0}', space=vmem, size = 0x4000, scoped, tag = 'output window, operand 0, single buffered']
    #allocation11 [shape = 'u8[4096]{0}', space=vmem, size = 0x1000, scoped, tag = 'output window, operand 1, single buffered']
    #allocation12 [shape = 's32[1]{0}', space=sflag, size = 0x4, scoped, tag = 'scoped memory for tpu_custom_call.1']
    %13 = vsyncpa [#allocation3], 0
    %14 = vsyncpa [#allocation6], 0
    %15 = vsyncpa [#allocation9], 0
    %16 = vsyncpa [#allocation4], 0
    %17 = vsyncpa [#allocation12], 0
    // Predicated region
    $region2: #{tpu_custom_call.1} parent=1 // pred_check
      _
    $region3: #{tpu_custom_call.1} parent=1 // pred_check_branch
      %19 = sbr.rel (0) target = $region5
    $region4: #{tpu_custom_call.1} parent=1 // pred_region
      %s21 = ssub.s32 128, 128
      %22 = vsyncadd [#allocation3], %s21
      %s24 = sshll.u32 [#allocation2], 4
      %s25 = int_to_ptr.vmem [resolvable:$true] %s24
      %27 = dma.hbm_to_vmem [thread:$0]  %s0, 128, %s25, [#allocation3]
    $region5: #{tpu_custom_call.1} parent=1 // pred_fallthru
      _
    // Predicated region
    $region6: #{tpu_custom_call.1} parent=1 // pred_check
      _
    $region7: #{tpu_custom_call.1} parent=1 // pred_check_branch
      %29 = sbr.rel (0) target = $region9
    $region8: #{tpu_custom_call.1} parent=1 // pred_region
      %s31 = ssub.s32 128, 128
      %32 = vsyncadd [#allocation6], %s31
      %s34 = sshll.u32 [#allocation5], 4
      %s35 = int_to_ptr.vmem [resolvable:$true] %s34
      %37 = dma.hbm_to_vmem [thread:$0]  %s1, 128, %s35, [#allocation6]
    $region9: #{tpu_custom_call.1} parent=1 // pred_fallthru
      _
    // Predicated region
    $region10: #{tpu_custom_call.1} parent=1 // pred_check
      _
    $region11: #{tpu_custom_call.1} parent=1 // pred_check_branch
      %39 = sbr.rel (0) target = $region13
    $region12: #{tpu_custom_call.1} parent=1 // pred_region
      %s41 = ssub.s32 8192, 8192
      %42 = vsyncadd [#allocation6], %s41
      %s43 = sshll.u32 [#allocation7], 4
      %s44 = int_to_ptr.vmem [resolvable:$true] %s43
      %49 = dma.hbm_to_vmem [thread:$0]  %s2, 8192, %s44, [#allocation6], 256, 256, 16
    $region13: #{tpu_custom_call.1} parent=1 // pred_fallthru
      _
    // Predicated region
    $region14: #{tpu_custom_call.1} parent=1 // pred_check
      _
    $region15: #{tpu_custom_call.1} parent=1 // pred_check_branch
      %51 = sbr.rel (0) target = $region17
    $region16: #{tpu_custom_call.1} parent=1 // pred_region
      _
    $region17: #{tpu_custom_call.1} parent=1 // pred_fallthru
      _
    // Predicated region
    $region18: #{tpu_custom_call.1} parent=1 // pred_check
      _
    $region19: #{tpu_custom_call.1} parent=1 // pred_check_branch
      %53 = sbr.rel (0) target = $region21
    $region20: #{tpu_custom_call.1} parent=1 // pred_region
      %s55 = ssub.s32 1024, 1024
      %56 = vsyncadd [#allocation9], %s55
      %s57 = sshll.u32 [#allocation8], 4
      %s58 = int_to_ptr.vmem [resolvable:$true] %s57
      %63 = dma.hbm_to_vmem [thread:$0]  %s4, 1024, %s58, [#allocation9], 64, 64, 4
    $region21: #{tpu_custom_call.1} parent=1 // pred_fallthru
      _
    // Predicated region
    $region22: #{tpu_custom_call.1} parent=1 // pred_check
      _
    $region23: #{tpu_custom_call.1} parent=1 // pred_check_branch
      %65 = sbr.rel (0) target = $region25
    $region24: #{tpu_custom_call.1} parent=1 // pred_region
      _
    $region25: #{tpu_custom_call.1} parent=1 // pred_fallthru
      _
    // Predicated region
    $region26: #{tpu_custom_call.1} parent=1 // pred_check
      _
    $region27: #{tpu_custom_call.1} parent=1 // pred_check_branch
      %67 = sbr.rel (0) target = $region29
    $region28: #{tpu_custom_call.1} parent=1 // pred_region
      %68 = dma.done [#allocation3], 128
    $region29: #{tpu_custom_call.1} parent=1 // pred_fallthru
      _
    // Predicated region
    $region30: #{tpu_custom_call.1} parent=1 // pred_check
      _
    $region31: #{tpu_custom_call.1} parent=1 // pred_check_branch
      %70 = sbr.rel (0) target = $region33
    $region32: #{tpu_custom_call.1} parent=1 // pred_region
      %71 = dma.done [#allocation6], 128
    $region33: #{tpu_custom_call.1} parent=1 // pred_fallthru
      _
    // Predicated region
    $region34: #{tpu_custom_call.1} parent=1 // pred_check
      _
    $region35: #{tpu_custom_call.1} parent=1 // pred_check_branch
      %73 = sbr.rel (0) target = $region37
    $region36: #{tpu_custom_call.1} parent=1 // pred_region
      %74 = dma.done [#allocation6], 8192
    $region37: #{tpu_custom_call.1} parent=1 // pred_fallthru
      _
    // Predicated region
    $region38: #{tpu_custom_call.1} parent=1 // pred_check
      _
    $region39: #{tpu_custom_call.1} parent=1 // pred_check_branch
      %76 = sbr.rel (0) target = $region41
    $region40: #{tpu_custom_call.1} parent=1 // pred_region
      %77 = dma.done [#allocation9], 1024
    $region41: #{tpu_custom_call.1} parent=1 // pred_fallthru
      _
    %v79 = vld [vmem:[%s3] sm:$0xf]
    %v81 = vlaneseq
    %v82 = vshrl.u32 %v81, 7
    %v83 = vsub.s32 0, %v82
    %v84 = vrot.slane %v79, %v83
    %v85 = vlaneseq
    %v86 = vshrl.u32 %v85, 7
    %v87 = vsub.s32 1, %v86
    %v88 = vrot.slane %v79, %v87
    %v89 = vlaneseq
    %v90 = vshrl.u32 %v89, 7
    %v91 = vsub.s32 2, %v90
    %v92 = vrot.slane %v79, %v91
    %v93 = vlaneseq
    %v94 = vshrl.u32 %v93, 7
    %v95 = vsub.s32 3, %v94
    %v96 = vrot.slane %v79, %v95
    %v101 = vld [vmem:[%s5] sm:$0x1]
    %v103 = vlaneseq
    %v104 = vshrl.u32 %v103, 7
    %v105 = vsub.s32 0, %v104
    %v106 = vrot.slane %v101, %v105
    %v108 = vld [vmem:[#allocation2] sm:$0xff]
    %v109 = vld [vmem:[#allocation5] sm:$0xff]
    %v110 = vpack.c.bf16 %v108, %v108
    %v111 = vpack.c.bf16 %v109, %v109
    %v112 = vld [vmem:[#allocation7] sm:$0xff]
    %v113 = vld [vmem:[#allocation7 + $0x8] sm:$0xff]
    %v114 = vld [vmem:[#allocation7 + $0x10] sm:$0xff]
    %v115 = vld [vmem:[#allocation7 + $0x18] sm:$0xff]
    %v116 = vld [vmem:[#allocation7 + $0x20] sm:$0xff]
    %v117 = vld [vmem:[#allocation7 + $0x28] sm:$0xff]
    %v118 = vld [vmem:[#allocation7 + $0x30] sm:$0xff]
    %v119 = vld [vmem:[#allocation7 + $0x38] sm:$0xff]
    %v120 = vld [vmem:[#allocation7 + $0x40] sm:$0xff]
    %v121 = vld [vmem:[#allocation7 + $0x48] sm:$0xff]
    %v122 = vld [vmem:[#allocation7 + $0x50] sm:$0xff]
    %v123 = vld [vmem:[#allocation7 + $0x58] sm:$0xff]
    %v124 = vld [vmem:[#allocation7 + $0x60] sm:$0xff]
    %v125 = vld [vmem:[#allocation7 + $0x68] sm:$0xff]
    %v126 = vld [vmem:[#allocation7 + $0x70] sm:$0xff]
    %v127 = vld [vmem:[#allocation7 + $0x78] sm:$0xff]
    %v128 = vld [vmem:[#allocation7 + $0x80] sm:$0xff]
    %v129 = vld [vmem:[#allocation7 + $0x88] sm:$0xff]
    %v130 = vld [vmem:[#allocation7 + $0x90] sm:$0xff]
    %v131 = vld [vmem:[#allocation7 + $0x98] sm:$0xff]
    %v132 = vld [vmem:[#allocation7 + $0xa0] sm:$0xff]
    %v133 = vld [vmem:[#allocation7 + $0xa8] sm:$0xff]
    %v134 = vld [vmem:[#allocation7 + $0xb0] sm:$0xff]
    %v135 = vld [vmem:[#allocation7 + $0xb8] sm:$0xff]
    %v136 = vld [vmem:[#allocation7 + $0xc0] sm:$0xff]
    %v137 = vld [vmem:[#allocation7 + $0xc8] sm:$0xff]
    %v138 = vld [vmem:[#allocation7 + $0xd0] sm:$0xff]
    %v139 = vld [vmem:[#allocation7 + $0xd8] sm:$0xff]
    %v140 = vld [vmem:[#allocation7 + $0xe0] sm:$0xff]
    %v141 = vld [vmem:[#allocation7 + $0xe8] sm:$0xff]
    %v142 = vld [vmem:[#allocation7 + $0xf0] sm:$0xff]
    %v143 = vld [vmem:[#allocation7 + $0xf8] sm:$0xff]
    %v144 = vld [vmem:[#allocation7 + $0x100] sm:$0xff]
    %v145 = vld [vmem:[#allocation7 + $0x108] sm:$0xff]
    %v146 = vld [vmem:[#allocation7 + $0x110] sm:$0xff]
    %v147 = vld [vmem:[#allocation7 + $0x118] sm:$0xff]
    %v148 = vld [vmem:[#allocation7 + $0x120] sm:$0xff]
    %v149 = vld [vmem:[#allocation7 + $0x128] sm:$0xff]
    %v150 = vld [vmem:[#allocation7 + $0x130] sm:$0xff]
    %v151 = vld [vmem:[#allocation7 + $0x138] sm:$0xff]
    %v152 = vld [vmem:[#allocation7 + $0x140] sm:$0xff]
    %v153 = vld [vmem:[#allocation7 + $0x148] sm:$0xff]
    %v154 = vld [vmem:[#allocation7 + $0x150] sm:$0xff]
    %v155 = vld [vmem:[#allocation7 + $0x158] sm:$0xff]
    %v156 = vld [vmem:[#allocation7 + $0x160] sm:$0xff]
    %v157 = vld [vmem:[#allocation7 + $0x168] sm:$0xff]
    %v158 = vld [vmem:[#allocation7 + $0x170] sm:$0xff]
    %v159 = vld [vmem:[#allocation7 + $0x178] sm:$0xff]
    %v160 = vld [vmem:[#allocation7 + $0x180] sm:$0xff]
    %v161 = vld [vmem:[#allocation7 + $0x188] sm:$0xff]
    %v162 = vld [vmem:[#allocation7 + $0x190] sm:$0xff]
    %v163 = vld [vmem:[#allocation7 + $0x198] sm:$0xff]
    %v164 = vld [vmem:[#allocation7 + $0x1a0] sm:$0xff]
    %v165 = vld [vmem:[#allocation7 + $0x1a8] sm:$0xff]
    %v166 = vld [vmem:[#allocation7 + $0x1b0] sm:$0xff]
    %v167 = vld [vmem:[#allocation7 + $0x1b8] sm:$0xff]
    %v168 = vld [vmem:[#allocation7 + $0x1c0] sm:$0xff]
    %v169 = vld [vmem:[#allocation7 + $0x1c8] sm:$0xff]
    %v170 = vld [vmem:[#allocation7 + $0x1d0] sm:$0xff]
    %v171 = vld [vmem:[#allocation7 + $0x1d8] sm:$0xff]
    %v172 = vld [vmem:[#allocation7 + $0x1e0] sm:$0xff]
    %v173 = vld [vmem:[#allocation7 + $0x1e8] sm:$0xff]
    %v174 = vld [vmem:[#allocation7 + $0x1f0] sm:$0xff]
    %v175 = vld [vmem:[#allocation7 + $0x1f8] sm:$0xff]
    %v240 = vunpack.c.l.b16 %v112
    %v241 = vunpack.c.h.b16 %v112
    %v242 = vunpack.c.l.b16 %v113
    %v243 = vunpack.c.h.b16 %v113
    %v244 = vunpack.c.l.b16 %v114
    %v245 = vunpack.c.h.b16 %v114
    %v246 = vunpack.c.l.b16 %v115
    %v247 = vunpack.c.h.b16 %v115
    %v248 = vunpack.c.l.b16 %v116
    %v249 = vunpack.c.h.b16 %v116
    %v250 = vunpack.c.l.b16 %v117
    %v251 = vunpack.c.h.b16 %v117
    %v252 = vunpack.c.l.b16 %v118
    %v253 = vunpack.c.h.b16 %v118
    %v254 = vunpack.c.l.b16 %v119
    %v255 = vunpack.c.h.b16 %v119
    %v256 = vunpack.c.l.b16 %v120
    %v257 = vunpack.c.h.b16 %v120
    %v258 = vunpack.c.l.b16 %v121
    %v259 = vunpack.c.h.b16 %v121
    %v260 = vunpack.c.l.b16 %v122
    %v261 = vunpack.c.h.b16 %v122
    %v262 = vunpack.c.l.b16 %v123
    %v263 = vunpack.c.h.b16 %v123
    %v264 = vunpack.c.l.b16 %v124
    %v265 = vunpack.c.h.b16 %v124
    %v266 = vunpack.c.l.b16 %v125
    %v267 = vunpack.c.h.b16 %v125
    %v268 = vunpack.c.l.b16 %v126
    %v269 = vunpack.c.h.b16 %v126
    %v270 = vunpack.c.l.b16 %v127
    %v271 = vunpack.c.h.b16 %v127
    %v272 = vunpack.c.l.b16 %v128
    %v273 = vunpack.c.h.b16 %v128
    %v274 = vunpack.c.l.b16 %v129
    %v275 = vunpack.c.h.b16 %v129
    %v276 = vunpack.c.l.b16 %v130
    %v277 = vunpack.c.h.b16 %v130
    %v278 = vunpack.c.l.b16 %v131
    %v279 = vunpack.c.h.b16 %v131
    %v280 = vunpack.c.l.b16 %v132
    %v281 = vunpack.c.h.b16 %v132
    %v282 = vunpack.c.l.b16 %v133
    %v283 = vunpack.c.h.b16 %v133
    %v284 = vunpack.c.l.b16 %v134
    %v285 = vunpack.c.h.b16 %v134
    %v286 = vunpack.c.l.b16 %v135
    %v287 = vunpack.c.h.b16 %v135
    %v288 = vunpack.c.l.b16 %v136
    %v289 = vunpack.c.h.b16 %v136
    %v290 = vunpack.c.l.b16 %v137
    %v291 = vunpack.c.h.b16 %v137
    %v292 = vunpack.c.l.b16 %v138
    %v293 = vunpack.c.h.b16 %v138
    %v294 = vunpack.c.l.b16 %v139
    %v295 = vunpack.c.h.b16 %v139
    %v296 = vunpack.c.l.b16 %v140
    %v297 = vunpack.c.h.b16 %v140
    %v298 = vunpack.c.l.b16 %v141
    %v299 = vunpack.c.h.b16 %v141
    %v300 = vunpack.c.l.b16 %v142
    %v301 = vunpack.c.h.b16 %v142
    %v302 = vunpack.c.l.b16 %v143
    %v303 = vunpack.c.h.b16 %v143
    %v304 = vunpack.c.l.b16 %v144
    %v305 = vunpack.c.h.b16 %v144
    %v306 = vunpack.c.l.b16 %v145
    %v307 = vunpack.c.h.b16 %v145
    %v308 = vunpack.c.l.b16 %v146
    %v309 = vunpack.c.h.b16 %v146
    %v310 = vunpack.c.l.b16 %v147
    %v311 = vunpack.c.h.b16 %v147
    %v312 = vunpack.c.l.b16 %v148
    %v313 = vunpack.c.h.b16 %v148
    %v314 = vunpack.c.l.b16 %v149
    %v315 = vunpack.c.h.b16 %v149
    %v316 = vunpack.c.l.b16 %v150
    %v317 = vunpack.c.h.b16 %v150
    %v318 = vunpack.c.l.b16 %v151
    %v319 = vunpack.c.h.b16 %v151
    %v320 = vunpack.c.l.b16 %v152
    %v321 = vunpack.c.h.b16 %v152
    %v322 = vunpack.c.l.b16 %v153
    %v323 = vunpack.c.h.b16 %v153
    %v324 = vunpack.c.l.b16 %v154
    %v325 = vunpack.c.h.b16 %v154
    %v326 = vunpack.c.l.b16 %v155
    %v327 = vunpack.c.h.b16 %v155
    %v328 = vunpack.c.l.b16 %v156
    %v329 = vunpack.c.h.b16 %v156
    %v330 = vunpack.c.l.b16 %v157
    %v331 = vunpack.c.h.b16 %v157
    %v332 = vunpack.c.l.b16 %v158
    %v333 = vunpack.c.h.b16 %v158
    %v334 = vunpack.c.l.b16 %v159
    %v335 = vunpack.c.h.b16 %v159
    %v336 = vunpack.c.l.b16 %v160
    %v337 = vunpack.c.h.b16 %v160
    %v338 = vunpack.c.l.b16 %v161
    %v339 = vunpack.c.h.b16 %v161
    %v340 = vunpack.c.l.b16 %v162
    %v341 = vunpack.c.h.b16 %v162
    %v342 = vunpack.c.l.b16 %v163
    %v343 = vunpack.c.h.b16 %v163
    %v344 = vunpack.c.l.b16 %v164
    %v345 = vunpack.c.h.b16 %v164
    %v346 = vunpack.c.l.b16 %v165
    %v347 = vunpack.c.h.b16 %v165
    %v348 = vunpack.c.l.b16 %v166
    %v349 = vunpack.c.h.b16 %v166
    %v350 = vunpack.c.l.b16 %v167
    %v351 = vunpack.c.h.b16 %v167
    %v352 = vunpack.c.l.b16 %v168
    %v353 = vunpack.c.h.b16 %v168
    %v354 = vunpack.c.l.b16 %v169
    %v355 = vunpack.c.h.b16 %v169
    %v356 = vunpack.c.l.b16 %v170
    %v357 = vunpack.c.h.b16 %v170
    %v358 = vunpack.c.l.b16 %v171
    %v359 = vunpack.c.h.b16 %v171
    %v360 = vunpack.c.l.b16 %v172
    %v361 = vunpack.c.h.b16 %v172
    %v362 = vunpack.c.l.b16 %v173
    %v363 = vunpack.c.h.b16 %v173
    %v364 = vunpack.c.l.b16 %v174
    %v365 = vunpack.c.h.b16 %v174
    %v366 = vunpack.c.l.b16 %v175
    %v367 = vunpack.c.h.b16 %v175
    %v368 = vpack.c.b16 %v244, %v240
    %v369 = vpack.c.b16 %v245, %v241
    %v370 = vpack.c.b16 %v246, %v242
    %v371 = vpack.c.b16 %v247, %v243
    %v372 = vpack.c.b16 %v252, %v248
    %v373 = vpack.c.b16 %v253, %v249
    %v374 = vpack.c.b16 %v254, %v250
    %v375 = vpack.c.b16 %v255, %v251
    %v376 = vpack.c.b16 %v260, %v256
    %v377 = vpack.c.b16 %v261, %v257
    %v378 = vpack.c.b16 %v262, %v258
    %v379 = vpack.c.b16 %v263, %v259
    %v380 = vpack.c.b16 %v268, %v264
    %v381 = vpack.c.b16 %v269, %v265
    %v382 = vpack.c.b16 %v270, %v266
    %v383 = vpack.c.b16 %v271, %v267
    %v384 = vpack.c.b16 %v276, %v272
    %v385 = vpack.c.b16 %v277, %v273
    %v386 = vpack.c.b16 %v278, %v274
    %v387 = vpack.c.b16 %v279, %v275
    %v388 = vpack.c.b16 %v284, %v280
    %v389 = vpack.c.b16 %v285, %v281
    %v390 = vpack.c.b16 %v286, %v282
    %v391 = vpack.c.b16 %v287, %v283
    %v392 = vpack.c.b16 %v292, %v288
    %v393 = vpack.c.b16 %v293, %v289
    %v394 = vpack.c.b16 %v294, %v290
    %v395 = vpack.c.b16 %v295, %v291
    %v396 = vpack.c.b16 %v300, %v296
    %v397 = vpack.c.b16 %v301, %v297
    %v398 = vpack.c.b16 %v302, %v298
    %v399 = vpack.c.b16 %v303, %v299
    %v400 = vpack.c.b16 %v308, %v304
    %v401 = vpack.c.b16 %v309, %v305
    %v402 = vpack.c.b16 %v310, %v306
    %v403 = vpack.c.b16 %v311, %v307
    %v404 = vpack.c.b16 %v316, %v312
    %v405 = vpack.c.b16 %v317, %v313
    %v406 = vpack.c.b16 %v318, %v314
    %v407 = vpack.c.b16 %v319, %v315
    %v408 = vpack.c.b16 %v324, %v320
    %v409 = vpack.c.b16 %v325, %v321
    %v410 = vpack.c.b16 %v326, %v322
    %v411 = vpack.c.b16 %v327, %v323
    %v412 = vpack.c.b16 %v332, %v328
    %v413 = vpack.c.b16 %v333, %v329
    %v414 = vpack.c.b16 %v334, %v330
    %v415 = vpack.c.b16 %v335, %v331
    %v416 = vpack.c.b16 %v340, %v336
    %v417 = vpack.c.b16 %v341, %v337
    %v418 = vpack.c.b16 %v342, %v338
    %v419 = vpack.c.b16 %v343, %v339
    %v420 = vpack.c.b16 %v348, %v344
    %v421 = vpack.c.b16 %v349, %v345
    %v422 = vpack.c.b16 %v350, %v346
    %v423 = vpack.c.b16 %v351, %v347
    %v424 = vpack.c.b16 %v356, %v352
    %v425 = vpack.c.b16 %v357, %v353
    %v426 = vpack.c.b16 %v358, %v354
    %v427 = vpack.c.b16 %v359, %v355
    %v428 = vpack.c.b16 %v364, %v360
    %v429 = vpack.c.b16 %v365, %v361
    %v430 = vpack.c.b16 %v366, %v362
    %v431 = vpack.c.b16 %v367, %v363
    %496 = vmatprep.subr.bf16.mxu0 %v397
    %497 = vmatpush1.bf16.msra.mxu0 %v396
    %498 = vmatprep.subr.bf16.mxu0 %v393
    %499 = vmatpush1.bf16.msra.mxu0 %v392
    %500 = vmatprep.subr.bf16.mxu0 %v389
    %501 = vmatpush1.bf16.msra.mxu0 %v388
    %502 = vmatprep.subr.bf16.mxu0 %v385
    %503 = vmatpush1.bf16.msra.mxu0 %v384
    %504 = vmatprep.subr.bf16.mxu0 %v381
    %505 = vmatpush1.bf16.msra.mxu0 %v380
    %506 = vmatprep.subr.bf16.mxu0 %v377
    %507 = vmatpush1.bf16.msra.mxu0 %v376
    %508 = vmatprep.subr.bf16.mxu0 %v373
    %509 = vmatpush1.bf16.msra.mxu0 %v372
    %510 = vmatprep.subr.bf16.mxu0 %v369
    %511 = vmatpush1.bf16.msra.mxu0 %v368
    %512 = vmatprep.subr.bf16.mxu0 %v429
    %513 = vmatpush2.bf16.msra.mxu0 %v428
    %514 = vmatprep.subr.bf16.mxu0 %v425
    %515 = vmatpush2.bf16.msra.mxu0 %v424
    %516 = vmatprep.subr.bf16.mxu0 %v421
    %517 = vmatpush2.bf16.msra.mxu0 %v420
    %518 = vmatprep.subr.bf16.mxu0 %v417
    %519 = vmatpush2.bf16.msra.mxu0 %v416
    %520 = vmatprep.subr.bf16.mxu0 %v413
    %521 = vmatpush2.bf16.msra.mxu0 %v412
    %522 = vmatprep.subr.bf16.mxu0 %v409
    %523 = vmatpush2.bf16.msra.mxu0 %v408
    %524 = vmatprep.subr.bf16.mxu0 %v405
    %525 = vmatpush2.bf16.msra.mxu0 %v404
    %526 = vmatprep.subr.bf16.mxu0 %v401
    %527 = vmatpush2.bf16.msra.mxu0 %v400
    %528 = vmatprep.mubr.bf16.mxu0 %v111
    %529 = vmatmul.mubr.bf16.gmra.mxu0 %v110
    %v530 = vpop.f32.mrf.mxu0
    %v531 = vadd.f32 %v84, %v530
    %v532 = vpop.f32.mrf.mxu0
    %v533 = vadd.f32 %v88, %v532
    %v534 = vpop.f32.mrf.mxu0
    %v535 = vpop.f32.mrf.mxu0
    %536 = vdwg.mxu0
    %537 = vmatprep.subr.bf16.mxu0 %v399
    %538 = vmatpush1.bf16.msra.mxu0 %v398
    %539 = vmatprep.subr.bf16.mxu0 %v395
    %540 = vmatpush1.bf16.msra.mxu0 %v394
    %541 = vmatprep.subr.bf16.mxu0 %v391
    %542 = vmatpush1.bf16.msra.mxu0 %v390
    %543 = vmatprep.subr.bf16.mxu0 %v387
    %544 = vmatpush1.bf16.msra.mxu0 %v386
    %545 = vmatprep.subr.bf16.mxu0 %v383
    %546 = vmatpush1.bf16.msra.mxu0 %v382
    %547 = vmatprep.subr.bf16.mxu0 %v379
    %548 = vmatpush1.bf16.msra.mxu0 %v378
    %549 = vmatprep.subr.bf16.mxu0 %v375
    %550 = vmatpush1.bf16.msra.mxu0 %v374
    %551 = vmatprep.subr.bf16.mxu0 %v371
    %552 = vmatpush1.bf16.msra.mxu0 %v370
    %553 = vmatprep.subr.bf16.mxu0 %v431
    %554 = vmatpush2.bf16.msra.mxu0 %v430
    %555 = vmatprep.subr.bf16.mxu0 %v427
    %556 = vmatpush2.bf16.msra.mxu0 %v426
    %557 = vmatprep.subr.bf16.mxu0 %v423
    %558 = vmatpush2.bf16.msra.mxu0 %v422
    %559 = vmatprep.subr.bf16.mxu0 %v419
    %560 = vmatpush2.bf16.msra.mxu0 %v418
    %561 = vmatprep.subr.bf16.mxu0 %v415
    %562 = vmatpush2.bf16.msra.mxu0 %v414
    %563 = vmatprep.subr.bf16.mxu0 %v411
    %564 = vmatpush2.bf16.msra.mxu0 %v410
    %565 = vmatprep.subr.bf16.mxu0 %v407
    %566 = vmatpush2.bf16.msra.mxu0 %v406
    %567 = vmatprep.subr.bf16.mxu0 %v403
    %568 = vmatpush2.bf16.msra.mxu0 %v402
    %569 = vmatprep.mubr.bf16.mxu0 %v111
    %570 = vmatmul.mubr.bf16.gmra.mxu0 %v110
    %v571 = vpop.f32.mrf.mxu0
    %v572 = vadd.f32 %v92, %v571
    %v573 = vpop.f32.mrf.mxu0
    %v574 = vadd.f32 %v96, %v573
    %v575 = vpop.f32.mrf.mxu0
    %v576 = vpop.f32.mrf.mxu0
    %577 = vdwg.mxu0
    %v578 = vxor.u32 %v531, 2147483648
    %v579 = vmul.f32 %v578, 1.442695
    %v580 = vpow.pop %v579
    %v581 = vadd.f32 %v580, 1.0
    %v582 = vrcp.pop %v581
    %v583 = vmul.f32 1.0, %v582
    %v584 = vxor.u32 %v533, 2147483648
    %v585 = vmul.f32 %v584, 1.442695
    %v586 = vpow.pop %v585
    %v587 = vadd.f32 %v586, 1.0
    %v588 = vrcp.pop %v587
    %v589 = vmul.f32 1.0, %v588
    %v590 = vmul.f32 %v583, %v574
    %v591 = vadd.f32 %v572, %v590
    %v592 = vtanh.pop %v591
    %v593 = vsub.f32 1.0, %v589
    %v594 = vmul.f32 %v593, %v592
    %v595 = vmul.f32 %v589, %v109
    %v596 = vadd.f32 %v594, %v595
    %v597 = vpack.c.bf16 %v596, %v596
    %v598 = vld [vmem:[#allocation8] sm:$0xf]
    %v599 = vld [vmem:[#allocation8 + $0x4] sm:$0xf]
    %v600 = vld [vmem:[#allocation8 + $0x8] sm:$0xf]
    %v601 = vld [vmem:[#allocation8 + $0xc] sm:$0xf]
    %v602 = vld [vmem:[#allocation8 + $0x10] sm:$0xf]
    %v603 = vld [vmem:[#allocation8 + $0x14] sm:$0xf]
    %v604 = vld [vmem:[#allocation8 + $0x18] sm:$0xf]
    %v605 = vld [vmem:[#allocation8 + $0x1c] sm:$0xf]
    %v606 = vld [vmem:[#allocation8 + $0x20] sm:$0xf]
    %v607 = vld [vmem:[#allocation8 + $0x24] sm:$0xf]
    %v608 = vld [vmem:[#allocation8 + $0x28] sm:$0xf]
    %v609 = vld [vmem:[#allocation8 + $0x2c] sm:$0xf]
    %v610 = vld [vmem:[#allocation8 + $0x30] sm:$0xf]
    %v611 = vld [vmem:[#allocation8 + $0x34] sm:$0xf]
    %v612 = vld [vmem:[#allocation8 + $0x38] sm:$0xf]
    %v613 = vld [vmem:[#allocation8 + $0x3c] sm:$0xf]
    %v630 = vunpack.c.l.b16 %v598
    %v631 = vunpack.c.l.b16 %v599
    %v632 = vunpack.c.l.b16 %v600
    %v633 = vunpack.c.l.b16 %v601
    %v634 = vunpack.c.l.b16 %v602
    %v635 = vunpack.c.l.b16 %v603
    %v636 = vunpack.c.l.b16 %v604
    %v637 = vunpack.c.l.b16 %v605
    %v638 = vunpack.c.l.b16 %v606
    %v639 = vunpack.c.l.b16 %v607
    %v640 = vunpack.c.l.b16 %v608
    %v641 = vunpack.c.l.b16 %v609
    %v642 = vunpack.c.l.b16 %v610
    %v643 = vunpack.c.l.b16 %v611
    %v644 = vunpack.c.l.b16 %v612
    %v645 = vunpack.c.l.b16 %v613
    %v646 = vpack.c.b16 %v631, %v630
    %v647 = vpack.c.b16 %v633, %v632
    %v648 = vpack.c.b16 %v635, %v634
    %v649 = vpack.c.b16 %v637, %v636
    %v650 = vpack.c.b16 %v639, %v638
    %v651 = vpack.c.b16 %v641, %v640
    %v652 = vpack.c.b16 %v643, %v642
    %v653 = vpack.c.b16 %v645, %v644
    %662 = vmatprep.subr.bf16.mxu0 0
    %663 = vmatpush1.bf16.msra.mxu0 %v653
    %664 = vmatprep.subr.bf16.mxu0 0
    %665 = vmatpush1.bf16.msra.mxu0 %v652
    %666 = vmatprep.subr.bf16.mxu0 0
    %667 = vmatpush1.bf16.msra.mxu0 %v651
    %668 = vmatprep.subr.bf16.mxu0 0
    %669 = vmatpush1.bf16.msra.mxu0 %v650
    %670 = vmatprep.subr.bf16.mxu0 0
    %671 = vmatpush1.bf16.msra.mxu0 %v649
    %672 = vmatprep.subr.bf16.mxu0 0
    %673 = vmatpush1.bf16.msra.mxu0 %v648
    %674 = vmatprep.subr.bf16.mxu0 0
    %675 = vmatpush1.bf16.msra.mxu0 %v647
    %676 = vmatprep.subr.bf16.mxu0 0
    %677 = vmatpush1.bf16.msra.mxu0 %v646
    %678 = vmatprep.subr.bf16.mxu0 0
    %679 = vmatpush2.bf16.msra.mxu0 0
    %680 = vmatprep.subr.bf16.mxu0 0
    %681 = vmatpush2.bf16.msra.mxu0 0
    %682 = vmatprep.subr.bf16.mxu0 0
    %683 = vmatpush2.bf16.msra.mxu0 0
    %684 = vmatprep.subr.bf16.mxu0 0
    %685 = vmatpush2.bf16.msra.mxu0 0
    %686 = vmatprep.subr.bf16.mxu0 0
    %687 = vmatpush2.bf16.msra.mxu0 0
    %688 = vmatprep.subr.bf16.mxu0 0
    %689 = vmatpush2.bf16.msra.mxu0 0
    %690 = vmatprep.subr.bf16.mxu0 0
    %691 = vmatpush2.bf16.msra.mxu0 0
    %692 = vmatprep.subr.bf16.mxu0 0
    %693 = vmatpush2.bf16.msra.mxu0 0
    %694 = vmatprep.mubr.bf16.mxu0 0
    %695 = vmatmul.mubr.bf16.gmra.mxu0 %v597
    %v696 = vpop.f32.mrf.mxu0
    %v697 = vadd.f32 %v106, %v696
    %v698 = vpop.f32.mrf.mxu0
    %v699 = vpop.f32.mrf.mxu0
    %v700 = vpop.f32.mrf.mxu0
    %701 = vdwg.mxu0
    %v702 = vadd.f32 %v697, %v108
    %703 = vst [vmem:[#allocation10] sm:$0xff] %v702
    %v704 = vpack.c.bf16 %v702, %v702
    %v705 = vld [vmem:[#allocation7] sm:$0xff]
    %v706 = vld [vmem:[#allocation7 + $0x8] sm:$0xff]
    %v707 = vld [vmem:[#allocation7 + $0x10] sm:$0xff]
    %v708 = vld [vmem:[#allocation7 + $0x18] sm:$0xff]
    %v709 = vld [vmem:[#allocation7 + $0x20] sm:$0xff]
    %v710 = vld [vmem:[#allocation7 + $0x28] sm:$0xff]
    %v711 = vld [vmem:[#allocation7 + $0x30] sm:$0xff]
    %v712 = vld [vmem:[#allocation7 + $0x38] sm:$0xff]
    %v713 = vld [vmem:[#allocation7 + $0x40] sm:$0xff]
    %v714 = vld [vmem:[#allocation7 + $0x48] sm:$0xff]
    %v715 = vld [vmem:[#allocation7 + $0x50] sm:$0xff]
    %v716 = vld [vmem:[#allocation7 + $0x58] sm:$0xff]
    %v717 = vld [vmem:[#allocation7 + $0x60] sm:$0xff]
    %v718 = vld [vmem:[#allocation7 + $0x68] sm:$0xff]
    %v719 = vld [vmem:[#allocation7 + $0x70] sm:$0xff]
    %v720 = vld [vmem:[#allocation7 + $0x78] sm:$0xff]
    %v721 = vld [vmem:[#allocation7 + $0x80] sm:$0xff]
    %v722 = vld [vmem:[#allocation7 + $0x88] sm:$0xff]
    %v723 = vld [vmem:[#allocation7 + $0x90] sm:$0xff]
    %v724 = vld [vmem:[#allocation7 + $0x98] sm:$0xff]
    %v725 = vld [vmem:[#allocation7 + $0xa0] sm:$0xff]
    %v726 = vld [vmem:[#allocation7 + $0xa8] sm:$0xff]
    %v727 = vld [vmem:[#allocation7 + $0xb0] sm:$0xff]
    %v728 = vld [vmem:[#allocation7 + $0xb8] sm:$0xff]
    %v729 = vld [vmem:[#allocation7 + $0xc0] sm:$0xff]
    %v730 = vld [vmem:[#allocation7 + $0xc8] sm:$0xff]
    %v731 = vld [vmem:[#allocation7 + $0xd0] sm:$0xff]
    %v732 = vld [vmem:[#allocation7 + $0xd8] sm:$0xff]
    %v733 = vld [vmem:[#allocation7 + $0xe0] sm:$0xff]
    %v734 = vld [vmem:[#allocation7 + $0xe8] sm:$0xff]
    %v735 = vld [vmem:[#allocation7 + $0xf0] sm:$0xff]
    %v736 = vld [vmem:[#allocation7 + $0xf8] sm:$0xff]
    %v737 = vld [vmem:[#allocation7 + $0x100] sm:$0xff]
    %v738 = vld [vmem:[#allocation7 + $0x108] sm:$0xff]
    %v739 = vld [vmem:[#allocation7 + $0x110] sm:$0xff]
    %v740 = vld [vmem:[#allocation7 + $0x118] sm:$0xff]
    %v741 = vld [vmem:[#allocation7 + $0x120] sm:$0xff]
    %v742 = vld [vmem:[#allocation7 + $0x128] sm:$0xff]
    %v743 = vld [vmem:[#allocation7 + $0x130] sm:$0xff]
    %v744 = vld [vmem:[#allocation7 + $0x138] sm:$0xff]
    %v745 = vld [vmem:[#allocation7 + $0x140] sm:$0xff]
    %v746 = vld [vmem:[#allocation7 + $0x148] sm:$0xff]
    %v747 = vld [vmem:[#allocation7 + $0x150] sm:$0xff]
    %v748 = vld [vmem:[#allocation7 + $0x158] sm:$0xff]
    %v749 = vld [vmem:[#allocation7 + $0x160] sm:$0xff]
    %v750 = vld [vmem:[#allocation7 + $0x168] sm:$0xff]
    %v751 = vld [vmem:[#allocation7 + $0x170] sm:$0xff]
    %v752 = vld [vmem:[#allocation7 + $0x178] sm:$0xff]
    %v753 = vld [vmem:[#allocation7 + $0x180] sm:$0xff]
    %v754 = vld [vmem:[#allocation7 + $0x188] sm:$0xff]
    %v755 = vld [vmem:[#allocation7 + $0x190] sm:$0xff]
    %v756 = vld [vmem:[#allocation7 + $0x198] sm:$0xff]
    %v757 = vld [vmem:[#allocation7 + $0x1a0] sm:$0xff]
    %v758 = vld [vmem:[#allocation7 + $0x1a8] sm:$0xff]
    %v759 = vld [vmem:[#allocation7 + $0x1b0] sm:$0xff]
    %v760 = vld [vmem:[#allocation7 + $0x1b8] sm:$0xff]
    %v761 = vld [vmem:[#allocation7 + $0x1c0] sm:$0xff]
    %v762 = vld [vmem:[#allocation7 + $0x1c8] sm:$0xff]
    %v763 = vld [vmem:[#allocation7 + $0x1d0] sm:$0xff]
    %v764 = vld [vmem:[#allocation7 + $0x1d8] sm:$0xff]
    %v765 = vld [vmem:[#allocation7 + $0x1e0] sm:$0xff]
    %v766 = vld [vmem:[#allocation7 + $0x1e8] sm:$0xff]
    %v767 = vld [vmem:[#allocation7 + $0x1f0] sm:$0xff]
    %v768 = vld [vmem:[#allocation7 + $0x1f8] sm:$0xff]
    %v833 = vunpack.c.l.b16 %v705
    %v834 = vunpack.c.h.b16 %v705
    %v835 = vunpack.c.l.b16 %v706
    %v836 = vunpack.c.h.b16 %v706
    %v837 = vunpack.c.l.b16 %v707
    %v838 = vunpack.c.h.b16 %v707
    %v839 = vunpack.c.l.b16 %v708
    %v840 = vunpack.c.h.b16 %v708
    %v841 = vunpack.c.l.b16 %v709
    %v842 = vunpack.c.h.b16 %v709
    %v843 = vunpack.c.l.b16 %v710
    %v844 = vunpack.c.h.b16 %v710
    %v845 = vunpack.c.l.b16 %v711
    %v846 = vunpack.c.h.b16 %v711
    %v847 = vunpack.c.l.b16 %v712
    %v848 = vunpack.c.h.b16 %v712
    %v849 = vunpack.c.l.b16 %v713
    %v850 = vunpack.c.h.b16 %v713
    %v851 = vunpack.c.l.b16 %v714
    %v852 = vunpack.c.h.b16 %v714
    %v853 = vunpack.c.l.b16 %v715
    %v854 = vunpack.c.h.b16 %v715
    %v855 = vunpack.c.l.b16 %v716
    %v856 = vunpack.c.h.b16 %v716
    %v857 = vunpack.c.l.b16 %v717
    %v858 = vunpack.c.h.b16 %v717
    %v859 = vunpack.c.l.b16 %v718
    %v860 = vunpack.c.h.b16 %v718
    %v861 = vunpack.c.l.b16 %v719
    %v862 = vunpack.c.h.b16 %v719
    %v863 = vunpack.c.l.b16 %v720
    %v864 = vunpack.c.h.b16 %v720
    %v865 = vunpack.c.l.b16 %v721
    %v866 = vunpack.c.h.b16 %v721
    %v867 = vunpack.c.l.b16 %v722
    %v868 = vunpack.c.h.b16 %v722
    %v869 = vunpack.c.l.b16 %v723
    %v870 = vunpack.c.h.b16 %v723
    %v871 = vunpack.c.l.b16 %v724
    %v872 = vunpack.c.h.b16 %v724
    %v873 = vunpack.c.l.b16 %v725
    %v874 = vunpack.c.h.b16 %v725
    %v875 = vunpack.c.l.b16 %v726
    %v876 = vunpack.c.h.b16 %v726
    %v877 = vunpack.c.l.b16 %v727
    %v878 = vunpack.c.h.b16 %v727
    %v879 = vunpack.c.l.b16 %v728
    %v880 = vunpack.c.h.b16 %v728
    %v881 = vunpack.c.l.b16 %v729
    %v882 = vunpack.c.h.b16 %v729
    %v883 = vunpack.c.l.b16 %v730
    %v884 = vunpack.c.h.b16 %v730
    %v885 = vunpack.c.l.b16 %v731
    %v886 = vunpack.c.h.b16 %v731
    %v887 = vunpack.c.l.b16 %v732
    %v888 = vunpack.c.h.b16 %v732
    %v889 = vunpack.c.l.b16 %v733
    %v890 = vunpack.c.h.b16 %v733
    %v891 = vunpack.c.l.b16 %v734
    %v892 = vunpack.c.h.b16 %v734
    %v893 = vunpack.c.l.b16 %v735
    %v894 = vunpack.c.h.b16 %v735
    %v895 = vunpack.c.l.b16 %v736
    %v896 = vunpack.c.h.b16 %v736
    %v897 = vunpack.c.l.b16 %v737
    %v898 = vunpack.c.h.b16 %v737
    %v899 = vunpack.c.l.b16 %v738
    %v900 = vunpack.c.h.b16 %v738
    %v901 = vunpack.c.l.b16 %v739
    %v902 = vunpack.c.h.b16 %v739
    %v903 = vunpack.c.l.b16 %v740
    %v904 = vunpack.c.h.b16 %v740
    %v905 = vunpack.c.l.b16 %v741
    %v906 = vunpack.c.h.b16 %v741
    %v907 = vunpack.c.l.b16 %v742
    %v908 = vunpack.c.h.b16 %v742
    %v909 = vunpack.c.l.b16 %v743
    %v910 = vunpack.c.h.b16 %v743
    %v911 = vunpack.c.l.b16 %v744
    %v912 = vunpack.c.h.b16 %v744
    %v913 = vunpack.c.l.b16 %v745
    %v914 = vunpack.c.h.b16 %v745
    %v915 = vunpack.c.l.b16 %v746
    %v916 = vunpack.c.h.b16 %v746
    %v917 = vunpack.c.l.b16 %v747
    %v918 = vunpack.c.h.b16 %v747
    %v919 = vunpack.c.l.b16 %v748
    %v920 = vunpack.c.h.b16 %v748
    %v921 = vunpack.c.l.b16 %v749
    %v922 = vunpack.c.h.b16 %v749
    %v923 = vunpack.c.l.b16 %v750
    %v924 = vunpack.c.h.b16 %v750
    %v925 = vunpack.c.l.b16 %v751
    %v926 = vunpack.c.h.b16 %v751
    %v927 = vunpack.c.l.b16 %v752
    %v928 = vunpack.c.h.b16 %v752
    %v929 = vunpack.c.l.b16 %v753
    %v930 = vunpack.c.h.b16 %v753
    %v931 = vunpack.c.l.b16 %v754
    %v932 = vunpack.c.h.b16 %v754
    %v933 = vunpack.c.l.b16 %v755
    %v934 = vunpack.c.h.b16 %v755
    %v935 = vunpack.c.l.b16 %v756
    %v936 = vunpack.c.h.b16 %v756
    %v937 = vunpack.c.l.b16 %v757
    %v938 = vunpack.c.h.b16 %v757
    %v939 = vunpack.c.l.b16 %v758
    %v940 = vunpack.c.h.b16 %v758
    %v941 = vunpack.c.l.b16 %v759
    %v942 = vunpack.c.h.b16 %v759
    %v943 = vunpack.c.l.b16 %v760
    %v944 = vunpack.c.h.b16 %v760
    %v945 = vunpack.c.l.b16 %v761
    %v946 = vunpack.c.h.b16 %v761
    %v947 = vunpack.c.l.b16 %v762
    %v948 = vunpack.c.h.b16 %v762
    %v949 = vunpack.c.l.b16 %v763
    %v950 = vunpack.c.h.b16 %v763
    %v951 = vunpack.c.l.b16 %v764
    %v952 = vunpack.c.h.b16 %v764
    %v953 = vunpack.c.l.b16 %v765
    %v954 = vunpack.c.h.b16 %v765
    %v955 = vunpack.c.l.b16 %v766
    %v956 = vunpack.c.h.b16 %v766
    %v957 = vunpack.c.l.b16 %v767
    %v958 = vunpack.c.h.b16 %v767
    %v959 = vunpack.c.l.b16 %v768
    %v960 = vunpack.c.h.b16 %v768
    %v961 = vpack.c.b16 %v837, %v833
    %v962 = vpack.c.b16 %v838, %v834
    %v963 = vpack.c.b16 %v839, %v835
    %v964 = vpack.c.b16 %v840, %v836
    %v965 = vpack.c.b16 %v845, %v841
    %v966 = vpack.c.b16 %v846, %v842
    %v967 = vpack.c.b16 %v847, %v843
    %v968 = vpack.c.b16 %v848, %v844
    %v969 = vpack.c.b16 %v853, %v849
    %v970 = vpack.c.b16 %v854, %v850
    %v971 = vpack.c.b16 %v855, %v851
    %v972 = vpack.c.b16 %v856, %v852
    %v973 = vpack.c.b16 %v861, %v857
    %v974 = vpack.c.b16 %v862, %v858
    %v975 = vpack.c.b16 %v863, %v859
    %v976 = vpack.c.b16 %v864, %v860
    %v977 = vpack.c.b16 %v869, %v865
    %v978 = vpack.c.b16 %v870, %v866
    %v979 = vpack.c.b16 %v871, %v867
    %v980 = vpack.c.b16 %v872, %v868
    %v981 = vpack.c.b16 %v877, %v873
    %v982 = vpack.c.b16 %v878, %v874
    %v983 = vpack.c.b16 %v879, %v875
    %v984 = vpack.c.b16 %v880, %v876
    %v985 = vpack.c.b16 %v885, %v881
    %v986 = vpack.c.b16 %v886, %v882
    %v987 = vpack.c.b16 %v887, %v883
    %v988 = vpack.c.b16 %v888, %v884
    %v989 = vpack.c.b16 %v893, %v889
    %v990 = vpack.c.b16 %v894, %v890
    %v991 = vpack.c.b16 %v895, %v891
    %v992 = vpack.c.b16 %v896, %v892
    %v993 = vpack.c.b16 %v901, %v897
    %v994 = vpack.c.b16 %v902, %v898
    %v995 = vpack.c.b16 %v903, %v899
    %v996 = vpack.c.b16 %v904, %v900
    %v997 = vpack.c.b16 %v909, %v905
    %v998 = vpack.c.b16 %v910, %v906
    %v999 = vpack.c.b16 %v911, %v907
    %v1000 = vpack.c.b16 %v912, %v908
    %v1001 = vpack.c.b16 %v917, %v913
    %v1002 = vpack.c.b16 %v918, %v914
    %v1003 = vpack.c.b16 %v919, %v915
    %v1004 = vpack.c.b16 %v920, %v916
    %v1005 = vpack.c.b16 %v925, %v921
    %v1006 = vpack.c.b16 %v926, %v922
    %v1007 = vpack.c.b16 %v927, %v923
    %v1008 = vpack.c.b16 %v928, %v924
    %v1009 = vpack.c.b16 %v933, %v929
    %v1010 = vpack.c.b16 %v934, %v930
    %v1011 = vpack.c.b16 %v935, %v931
    %v1012 = vpack.c.b16 %v936, %v932
    %v1013 = vpack.c.b16 %v941, %v937
    %v1014 = vpack.c.b16 %v942, %v938
    %v1015 = vpack.c.b16 %v943, %v939
    %v1016 = vpack.c.b16 %v944, %v940
    %v1017 = vpack.c.b16 %v949, %v945
    %v1018 = vpack.c.b16 %v950, %v946
    %v1019 = vpack.c.b16 %v951, %v947
    %v1020 = vpack.c.b16 %v952, %v948
    %v1021 = vpack.c.b16 %v957, %v953
    %v1022 = vpack.c.b16 %v958, %v954
    %v1023 = vpack.c.b16 %v959, %v955
    %v1024 = vpack.c.b16 %v960, %v956
    %1089 = vmatprep.subr.bf16.mxu0 %v990
    %1090 = vmatpush1.bf16.msra.mxu0 %v989
    %1091 = vmatprep.subr.bf16.mxu0 %v986
    %1092 = vmatpush1.bf16.msra.mxu0 %v985
    %1093 = vmatprep.subr.bf16.mxu0 %v982
    %1094 = vmatpush1.bf16.msra.mxu0 %v981
    %1095 = vmatprep.subr.bf16.mxu0 %v978
    %1096 = vmatpush1.bf16.msra.mxu0 %v977
    %1097 = vmatprep.subr.bf16.mxu0 %v974
    %1098 = vmatpush1.bf16.msra.mxu0 %v973
    %1099 = vmatprep.subr.bf16.mxu0 %v970
    %1100 = vmatpush1.bf16.msra.mxu0 %v969
    %1101 = vmatprep.subr.bf16.mxu0 %v966
    %1102 = vmatpush1.bf16.msra.mxu0 %v965
    %1103 = vmatprep.subr.bf16.mxu0 %v962
    %1104 = vmatpush1.bf16.msra.mxu0 %v961
    %1105 = vmatprep.subr.bf16.mxu0 %v1022
    %1106 = vmatpush2.bf16.msra.mxu0 %v1021
    %1107 = vmatprep.subr.bf16.mxu0 %v1018
    %1108 = vmatpush2.bf16.msra.mxu0 %v1017
    %1109 = vmatprep.subr.bf16.mxu0 %v1014
    %1110 = vmatpush2.bf16.msra.mxu0 %v1013
    %1111 = vmatprep.subr.bf16.mxu0 %v1010
    %1112 = vmatpush2.bf16.msra.mxu0 %v1009
    %1113 = vmatprep.subr.bf16.mxu0 %v1006
    %1114 = vmatpush2.bf16.msra.mxu0 %v1005
    %1115 = vmatprep.subr.bf16.mxu0 %v1002
    %1116 = vmatpush2.bf16.msra.mxu0 %v1001
    %1117 = vmatprep.subr.bf16.mxu0 %v998
    %1118 = vmatpush2.bf16.msra.mxu0 %v997
    %1119 = vmatprep.subr.bf16.mxu0 %v994
    %1120 = vmatpush2.bf16.msra.mxu0 %v993
    %1121 = vmatprep.mubr.bf16.mxu0 %v597
    %1122 = vmatmul.mubr.bf16.gmra.mxu0 %v704
    %v1123 = vpop.f32.mrf.mxu0
    %v1124 = vadd.f32 %v84, %v1123
    %v1125 = vpop.f32.mrf.mxu0
    %v1126 = vadd.f32 %v88, %v1125
    %v1127 = vpop.f32.mrf.mxu0
    %v1128 = vpop.f32.mrf.mxu0
    %1129 = vdwg.mxu0
    %1130 = vmatprep.subr.bf16.mxu0 %v992
    %1131 = vmatpush1.bf16.msra.mxu0 %v991
    %1132 = vmatprep.subr.bf16.mxu0 %v988
    %1133 = vmatpush1.bf16.msra.mxu0 %v987
    %1134 = vmatprep.subr.bf16.mxu0 %v984
    %1135 = vmatpush1.bf16.msra.mxu0 %v983
    %1136 = vmatprep.subr.bf16.mxu0 %v980
    %1137 = vmatpush1.bf16.msra.mxu0 %v979
    %1138 = vmatprep.subr.bf16.mxu0 %v976
    %1139 = vmatpush1.bf16.msra.mxu0 %v975
    %1140 = vmatprep.subr.bf16.mxu0 %v972
    %1141 = vmatpush1.bf16.msra.mxu0 %v971
    %1142 = vmatprep.subr.bf16.mxu0 %v968
    %1143 = vmatpush1.bf16.msra.mxu0 %v967
    %1144 = vmatprep.subr.bf16.mxu0 %v964
    %1145 = vmatpush1.bf16.msra.mxu0 %v963
    %1146 = vmatprep.subr.bf16.mxu0 %v1024
    %1147 = vmatpush2.bf16.msra.mxu0 %v1023
    %1148 = vmatprep.subr.bf16.mxu0 %v1020
    %1149 = vmatpush2.bf16.msra.mxu0 %v1019
    %1150 = vmatprep.subr.bf16.mxu0 %v1016
    %1151 = vmatpush2.bf16.msra.mxu0 %v1015
    %1152 = vmatprep.subr.bf16.mxu0 %v1012
    %1153 = vmatpush2.bf16.msra.mxu0 %v1011
    %1154 = vmatprep.subr.bf16.mxu0 %v1008
    %1155 = vmatpush2.bf16.msra.mxu0 %v1007
    %1156 = vmatprep.subr.bf16.mxu0 %v1004
    %1157 = vmatpush2.bf16.msra.mxu0 %v1003
    %1158 = vmatprep.subr.bf16.mxu0 %v1000
    %1159 = vmatpush2.bf16.msra.mxu0 %v999
    %1160 = vmatprep.subr.bf16.mxu0 %v996
    %1161 = vmatpush2.bf16.msra.mxu0 %v995
    %1162 = vmatprep.mubr.bf16.mxu0 %v597
    %1163 = vmatmul.mubr.bf16.gmra.mxu0 %v704
    %v1164 = vpop.f32.mrf.mxu0
    %v1165 = vadd.f32 %v92, %v1164
    %v1166 = vpop.f32.mrf.mxu0
    %v1167 = vadd.f32 %v96, %v1166
    %v1168 = vpop.f32.mrf.mxu0
    %v1169 = vpop.f32.mrf.mxu0
    %1170 = vdwg.mxu0
    %v1171 = vxor.u32 %v1124, 2147483648
    %v1172 = vmul.f32 %v1171, 1.442695
    %v1173 = vpow.pop %v1172
    %v1174 = vadd.f32 %v1173, 1.0
    %v1175 = vrcp.pop %v1174
    %v1176 = vmul.f32 1.0, %v1175
    %v1177 = vxor.u32 %v1126, 2147483648
    %v1178 = vmul.f32 %v1177, 1.442695
    %v1179 = vpow.pop %v1178
    %v1180 = vadd.f32 %v1179, 1.0
    %v1181 = vrcp.pop %v1180
    %v1182 = vmul.f32 1.0, %v1181
    %v1183 = vmul.f32 %v1176, %v1167
    %v1184 = vadd.f32 %v1165, %v1183
    %v1185 = vtanh.pop %v1184
    %v1186 = vsub.f32 1.0, %v1182
    %v1187 = vmul.f32 %v1186, %v1185
    %v1188 = vmul.f32 %v1182, %v596
    %v1189 = vadd.f32 %v1187, %v1188
    %v1190 = vpack.c.bf16 %v1189, %v1189
    %v1191 = vld [vmem:[#allocation8] sm:$0xf]
    %v1192 = vld [vmem:[#allocation8 + $0x4] sm:$0xf]
    %v1193 = vld [vmem:[#allocation8 + $0x8] sm:$0xf]
    %v1194 = vld [vmem:[#allocation8 + $0xc] sm:$0xf]
    %v1195 = vld [vmem:[#allocation8 + $0x10] sm:$0xf]
    %v1196 = vld [vmem:[#allocation8 + $0x14] sm:$0xf]
    %v1197 = vld [vmem:[#allocation8 + $0x18] sm:$0xf]
    %v1198 = vld [vmem:[#allocation8 + $0x1c] sm:$0xf]
    %v1199 = vld [vmem:[#allocation8 + $0x20] sm:$0xf]
    %v1200 = vld [vmem:[#allocation8 + $0x24] sm:$0xf]
    %v1201 = vld [vmem:[#allocation8 + $0x28] sm:$0xf]
    %v1202 = vld [vmem:[#allocation8 + $0x2c] sm:$0xf]
    %v1203 = vld [vmem:[#allocation8 + $0x30] sm:$0xf]
    %v1204 = vld [vmem:[#allocation8 + $0x34] sm:$0xf]
    %v1205 = vld [vmem:[#allocation8 + $0x38] sm:$0xf]
    %v1206 = vld [vmem:[#allocation8 + $0x3c] sm:$0xf]
    %v1223 = vunpack.c.l.b16 %v1191
    %v1224 = vunpack.c.l.b16 %v1192
    %v1225 = vunpack.c.l.b16 %v1193
    %v1226 = vunpack.c.l.b16 %v1194
    %v1227 = vunpack.c.l.b16 %v1195
    %v1228 = vunpack.c.l.b16 %v1196
    %v1229 = vunpack.c.l.b16 %v1197
    %v1230 = vunpack.c.l.b16 %v1198
    %v1231 = vunpack.c.l.b16 %v1199
    %v1232 = vunpack.c.l.b16 %v1200
    %v1233 = vunpack.c.l.b16 %v1201
    %v1234 = vunpack.c.l.b16 %v1202
    %v1235 = vunpack.c.l.b16 %v1203
    %v1236 = vunpack.c.l.b16 %v1204
    %v1237 = vunpack.c.l.b16 %v1205
    %v1238 = vunpack.c.l.b16 %v1206
    %v1239 = vpack.c.b16 %v1224, %v1223
    %v1240 = vpack.c.b16 %v1226, %v1225
    %v1241 = vpack.c.b16 %v1228, %v1227
    %v1242 = vpack.c.b16 %v1230, %v1229
    %v1243 = vpack.c.b16 %v1232, %v1231
    %v1244 = vpack.c.b16 %v1234, %v1233
    %v1245 = vpack.c.b16 %v1236, %v1235
    %v1246 = vpack.c.b16 %v1238, %v1237
    %1255 = vmatprep.subr.bf16.mxu0 0
    %1256 = vmatpush1.bf16.msra.mxu0 %v1246
    %1257 = vmatprep.subr.bf16.mxu0 0
    %1258 = vmatpush1.bf16.msra.mxu0 %v1245
    %1259 = vmatprep.subr.bf16.mxu0 0
    %1260 = vmatpush1.bf16.msra.mxu0 %v1244
    %1261 = vmatprep.subr.bf16.mxu0 0
    %1262 = vmatpush1.bf16.msra.mxu0 %v1243
    %1263 = vmatprep.subr.bf16.mxu0 0
    %1264 = vmatpush1.bf16.msra.mxu0 %v1242
    %1265 = vmatprep.subr.bf16.mxu0 0
    %1266 = vmatpush1.bf16.msra.mxu0 %v1241
    %1267 = vmatprep.subr.bf16.mxu0 0
    %1268 = vmatpush1.bf16.msra.mxu0 %v1240
    %1269 = vmatprep.subr.bf16.mxu0 0
    %1270 = vmatpush1.bf16.msra.mxu0 %v1239
    %1271 = vmatprep.subr.bf16.mxu0 0
    %1272 = vmatpush2.bf16.msra.mxu0 0
    %1273 = vmatprep.subr.bf16.mxu0 0
    %1274 = vmatpush2.bf16.msra.mxu0 0
    %1275 = vmatprep.subr.bf16.mxu0 0
    %1276 = vmatpush2.bf16.msra.mxu0 0
    %1277 = vmatprep.subr.bf16.mxu0 0
    %1278 = vmatpush2.bf16.msra.mxu0 0
    %1279 = vmatprep.subr.bf16.mxu0 0
    %1280 = vmatpush2.bf16.msra.mxu0 0
    %1281 = vmatprep.subr.bf16.mxu0 0
    %1282 = vmatpush2.bf16.msra.mxu0 0
    %1283 = vmatprep.subr.bf16.mxu0 0
    %1284 = vmatpush2.bf16.msra.mxu0 0
    %1285 = vmatprep.subr.bf16.mxu0 0
    %1286 = vmatpush2.bf16.msra.mxu0 0
    %1287 = vmatprep.mubr.bf16.mxu0 0
    %1288 = vmatmul.mubr.bf16.gmra.mxu0 %v1190
    %v1289 = vpop.f32.mrf.mxu0
    %v1290 = vadd.f32 %v106, %v1289
    %v1291 = vpop.f32.mrf.mxu0
    %v1292 = vpop.f32.mrf.mxu0
    %v1293 = vpop.f32.mrf.mxu0
    %1294 = vdwg.mxu0
    %v1295 = vadd.f32 %v1290, %v702
    %s1296 = scalar_lea.vmem [#allocation10], 8
    %1297 = vst [vmem:[%s1296] sm:$0xff] %v1295
    %v1298 = vpack.c.bf16 %v1295, %v1295
    %v1299 = vld [vmem:[#allocation7] sm:$0xff]
    %v1300 = vld [vmem:[#allocation7 + $0x8] sm:$0xff]
    %v1301 = vld [vmem:[#allocation7 + $0x10] sm:$0xff]
    %v1302 = vld [vmem:[#allocation7 + $0x18] sm:$0xff]
    %v1303 = vld [vmem:[#allocation7 + $0x20] sm:$0xff]
    %v1304 = vld [vmem:[#allocation7 + $0x28] sm:$0xff]
    %v1305 = vld [vmem:[#allocation7 + $0x30] sm:$0xff]
    %v1306 = vld [vmem:[#allocation7 + $0x38] sm:$0xff]
    %v1307 = vld [vmem:[#allocation7 + $0x40] sm:$0xff]
    %v1308 = vld [vmem:[#allocation7 + $0x48] sm:$0xff]
    %v1309 = vld [vmem:[#allocation7 + $0x50] sm:$0xff]
    %v1310 = vld [vmem:[#allocation7 + $0x58] sm:$0xff]
    %v1311 = vld [vmem:[#allocation7 + $0x60] sm:$0xff]
    %v1312 = vld [vmem:[#allocation7 + $0x68] sm:$0xff]
    %v1313 = vld [vmem:[#allocation7 + $0x70] sm:$0xff]
    %v1314 = vld [vmem:[#allocation7 + $0x78] sm:$0xff]
    %v1315 = vld [vmem:[#allocation7 + $0x80] sm:$0xff]
    %v1316 = vld [vmem:[#allocation7 + $0x88] sm:$0xff]
    %v1317 = vld [vmem:[#allocation7 + $0x90] sm:$0xff]
    %v1318 = vld [vmem:[#allocation7 + $0x98] sm:$0xff]
    %v1319 = vld [vmem:[#allocation7 + $0xa0] sm:$0xff]
    %v1320 = vld [vmem:[#allocation7 + $0xa8] sm:$0xff]
    %v1321 = vld [vmem:[#allocation7 + $0xb0] sm:$0xff]
    %v1322 = vld [vmem:[#allocation7 + $0xb8] sm:$0xff]
    %v1323 = vld [vmem:[#allocation7 + $0xc0] sm:$0xff]
    %v1324 = vld [vmem:[#allocation7 + $0xc8] sm:$0xff]
    %v1325 = vld [vmem:[#allocation7 + $0xd0] sm:$0xff]
    %v1326 = vld [vmem:[#allocation7 + $0xd8] sm:$0xff]
    %v1327 = vld [vmem:[#allocation7 + $0xe0] sm:$0xff]
    %v1328 = vld [vmem:[#allocation7 + $0xe8] sm:$0xff]
    %v1329 = vld [vmem:[#allocation7 + $0xf0] sm:$0xff]
    %v1330 = vld [vmem:[#allocation7 + $0xf8] sm:$0xff]
    %v1331 = vld [vmem:[#allocation7 + $0x100] sm:$0xff]
    %v1332 = vld [vmem:[#allocation7 + $0x108] sm:$0xff]
    %v1333 = vld [vmem:[#allocation7 + $0x110] sm:$0xff]
    %v1334 = vld [vmem:[#allocation7 + $0x118] sm:$0xff]
    %v1335 = vld [vmem:[#allocation7 + $0x120] sm:$0xff]
    %v1336 = vld [vmem:[#allocation7 + $0x128] sm:$0xff]
    %v1337 = vld [vmem:[#allocation7 + $0x130] sm:$0xff]
    %v1338 = vld [vmem:[#allocation7 + $0x138] sm:$0xff]
    %v1339 = vld [vmem:[#allocation7 + $0x140] sm:$0xff]
    %v1340 = vld [vmem:[#allocation7 + $0x148] sm:$0xff]
    %v1341 = vld [vmem:[#allocation7 + $0x150] sm:$0xff]
    %v1342 = vld [vmem:[#allocation7 + $0x158] sm:$0xff]
    %v1343 = vld [vmem:[#allocation7 + $0x160] sm:$0xff]
    %v1344 = vld [vmem:[#allocation7 + $0x168] sm:$0xff]
    %v1345 = vld [vmem:[#allocation7 + $0x170] sm:$0xff]
    %v1346 = vld [vmem:[#allocation7 + $0x178] sm:$0xff]
    %v1347 = vld [vmem:[#allocation7 + $0x180] sm:$0xff]
    %v1348 = vld [vmem:[#allocation7 + $0x188] sm:$0xff]
    %v1349 = vld [vmem:[#allocation7 + $0x190] sm:$0xff]
    %v1350 = vld [vmem:[#allocation7 + $0x198] sm:$0xff]
    %v1351 = vld [vmem:[#allocation7 + $0x1a0] sm:$0xff]
    %v1352 = vld [vmem:[#allocation7 + $0x1a8] sm:$0xff]
    %v1353 = vld [vmem:[#allocation7 + $0x1b0] sm:$0xff]
    %v1354 = vld [vmem:[#allocation7 + $0x1b8] sm:$0xff]
    %v1355 = vld [vmem:[#allocation7 + $0x1c0] sm:$0xff]
    %v1356 = vld [vmem:[#allocation7 + $0x1c8] sm:$0xff]
    %v1357 = vld [vmem:[#allocation7 + $0x1d0] sm:$0xff]
    %v1358 = vld [vmem:[#allocation7 + $0x1d8] sm:$0xff]
    %v1359 = vld [vmem:[#allocation7 + $0x1e0] sm:$0xff]
    %v1360 = vld [vmem:[#allocation7 + $0x1e8] sm:$0xff]
    %v1361 = vld [vmem:[#allocation7 + $0x1f0] sm:$0xff]
    %v1362 = vld [vmem:[#allocation7 + $0x1f8] sm:$0xff]
    %v1427 = vunpack.c.l.b16 %v1299
    %v1428 = vunpack.c.h.b16 %v1299
    %v1429 = vunpack.c.l.b16 %v1300
    %v1430 = vunpack.c.h.b16 %v1300
    %v1431 = vunpack.c.l.b16 %v1301
    %v1432 = vunpack.c.h.b16 %v1301
    %v1433 = vunpack.c.l.b16 %v1302
    %v1434 = vunpack.c.h.b16 %v1302
    %v1435 = vunpack.c.l.b16 %v1303
    %v1436 = vunpack.c.h.b16 %v1303
    %v1437 = vunpack.c.l.b16 %v1304
    %v1438 = vunpack.c.h.b16 %v1304
    %v1439 = vunpack.c.l.b16 %v1305
    %v1440 = vunpack.c.h.b16 %v1305
    %v1441 = vunpack.c.l.b16 %v1306
    %v1442 = vunpack.c.h.b16 %v1306
    %v1443 = vunpack.c.l.b16 %v1307
    %v1444 = vunpack.c.h.b16 %v1307
    %v1445 = vunpack.c.l.b16 %v1308
    %v1446 = vunpack.c.h.b16 %v1308
    %v1447 = vunpack.c.l.b16 %v1309
    %v1448 = vunpack.c.h.b16 %v1309
    %v1449 = vunpack.c.l.b16 %v1310
    %v1450 = vunpack.c.h.b16 %v1310
    %v1451 = vunpack.c.l.b16 %v1311
    %v1452 = vunpack.c.h.b16 %v1311
    %v1453 = vunpack.c.l.b16 %v1312
    %v1454 = vunpack.c.h.b16 %v1312
    %v1455 = vunpack.c.l.b16 %v1313
    %v1456 = vunpack.c.h.b16 %v1313
    %v1457 = vunpack.c.l.b16 %v1314
    %v1458 = vunpack.c.h.b16 %v1314
    %v1459 = vunpack.c.l.b16 %v1315
    %v1460 = vunpack.c.h.b16 %v1315
    %v1461 = vunpack.c.l.b16 %v1316
    %v1462 = vunpack.c.h.b16 %v1316
    %v1463 = vunpack.c.l.b16 %v1317
    %v1464 = vunpack.c.h.b16 %v1317
    %v1465 = vunpack.c.l.b16 %v1318
    %v1466 = vunpack.c.h.b16 %v1318
    %v1467 = vunpack.c.l.b16 %v1319
    %v1468 = vunpack.c.h.b16 %v1319
    %v1469 = vunpack.c.l.b16 %v1320
    %v1470 = vunpack.c.h.b16 %v1320
    %v1471 = vunpack.c.l.b16 %v1321
    %v1472 = vunpack.c.h.b16 %v1321
    %v1473 = vunpack.c.l.b16 %v1322
    %v1474 = vunpack.c.h.b16 %v1322
    %v1475 = vunpack.c.l.b16 %v1323
    %v1476 = vunpack.c.h.b16 %v1323
    %v1477 = vunpack.c.l.b16 %v1324
    %v1478 = vunpack.c.h.b16 %v1324
    %v1479 = vunpack.c.l.b16 %v1325
    %v1480 = vunpack.c.h.b16 %v1325
    %v1481 = vunpack.c.l.b16 %v1326
    %v1482 = vunpack.c.h.b16 %v1326
    %v1483 = vunpack.c.l.b16 %v1327
    %v1484 = vunpack.c.h.b16 %v1327
    %v1485 = vunpack.c.l.b16 %v1328
    %v1486 = vunpack.c.h.b16 %v1328
    %v1487 = vunpack.c.l.b16 %v1329
    %v1488 = vunpack.c.h.b16 %v1329
    %v1489 = vunpack.c.l.b16 %v1330
    %v1490 = vunpack.c.h.b16 %v1330
    %v1491 = vunpack.c.l.b16 %v1331
    %v1492 = vunpack.c.h.b16 %v1331
    %v1493 = vunpack.c.l.b16 %v1332
    %v1494 = vunpack.c.h.b16 %v1332
    %v1495 = vunpack.c.l.b16 %v1333
    %v1496 = vunpack.c.h.b16 %v1333
    %v1497 = vunpack.c.l.b16 %v1334
    %v1498 = vunpack.c.h.b16 %v1334
    %v1499 = vunpack.c.l.b16 %v1335
    %v1500 = vunpack.c.h.b16 %v1335
    %v1501 = vunpack.c.l.b16 %v1336
    %v1502 = vunpack.c.h.b16 %v1336
    %v1503 = vunpack.c.l.b16 %v1337
    %v1504 = vunpack.c.h.b16 %v1337
    %v1505 = vunpack.c.l.b16 %v1338
    %v1506 = vunpack.c.h.b16 %v1338
    %v1507 = vunpack.c.l.b16 %v1339
    %v1508 = vunpack.c.h.b16 %v1339
    %v1509 = vunpack.c.l.b16 %v1340
    %v1510 = vunpack.c.h.b16 %v1340
    %v1511 = vunpack.c.l.b16 %v1341
    %v1512 = vunpack.c.h.b16 %v1341
    %v1513 = vunpack.c.l.b16 %v1342
    %v1514 = vunpack.c.h.b16 %v1342
    %v1515 = vunpack.c.l.b16 %v1343
    %v1516 = vunpack.c.h.b16 %v1343
    %v1517 = vunpack.c.l.b16 %v1344
    %v1518 = vunpack.c.h.b16 %v1344
    %v1519 = vunpack.c.l.b16 %v1345
    %v1520 = vunpack.c.h.b16 %v1345
    %v1521 = vunpack.c.l.b16 %v1346
    %v1522 = vunpack.c.h.b16 %v1346
    %v1523 = vunpack.c.l.b16 %v1347
    %v1524 = vunpack.c.h.b16 %v1347
    %v1525 = vunpack.c.l.b16 %v1348
    %v1526 = vunpack.c.h.b16 %v1348
    %v1527 = vunpack.c.l.b16 %v1349
    %v1528 = vunpack.c.h.b16 %v1349
    %v1529 = vunpack.c.l.b16 %v1350
    %v1530 = vunpack.c.h.b16 %v1350
    %v1531 = vunpack.c.l.b16 %v1351
    %v1532 = vunpack.c.h.b16 %v1351
    %v1533 = vunpack.c.l.b16 %v1352
    %v1534 = vunpack.c.h.b16 %v1352
    %v1535 = vunpack.c.l.b16 %v1353
    %v1536 = vunpack.c.h.b16 %v1353
    %v1537 = vunpack.c.l.b16 %v1354
    %v1538 = vunpack.c.h.b16 %v1354
    %v1539 = vunpack.c.l.b16 %v1355
    %v1540 = vunpack.c.h.b16 %v1355
    %v1541 = vunpack.c.l.b16 %v1356
    %v1542 = vunpack.c.h.b16 %v1356
    %v1543 = vunpack.c.l.b16 %v1357
    %v1544 = vunpack.c.h.b16 %v1357
    %v1545 = vunpack.c.l.b16 %v1358
    %v1546 = vunpack.c.h.b16 %v1358
    %v1547 = vunpack.c.l.b16 %v1359
    %v1548 = vunpack.c.h.b16 %v1359
    %v1549 = vunpack.c.l.b16 %v1360
    %v1550 = vunpack.c.h.b16 %v1360
    %v1551 = vunpack.c.l.b16 %v1361
    %v1552 = vunpack.c.h.b16 %v1361
    %v1553 = vunpack.c.l.b16 %v1362
    %v1554 = vunpack.c.h.b16 %v1362
    %v1555 = vpack.c.b16 %v1431, %v1427
    %v1556 = vpack.c.b16 %v1432, %v1428
    %v1557 = vpack.c.b16 %v1433, %v1429
    %v1558 = vpack.c.b16 %v1434, %v1430
    %v1559 = vpack.c.b16 %v1439, %v1435
    %v1560 = vpack.c.b16 %v1440, %v1436
    %v1561 = vpack.c.b16 %v1441, %v1437
    %v1562 = vpack.c.b16 %v1442, %v1438
    %v1563 = vpack.c.b16 %v1447, %v1443
    %v1564 = vpack.c.b16 %v1448, %v1444
    %v1565 = vpack.c.b16 %v1449, %v1445
    %v1566 = vpack.c.b16 %v1450, %v1446
    %v1567 = vpack.c.b16 %v1455, %v1451
    %v1568 = vpack.c.b16 %v1456, %v1452
    %v1569 = vpack.c.b16 %v1457, %v1453
    %v1570 = vpack.c.b16 %v1458, %v1454
    %v1571 = vpack.c.b16 %v1463, %v1459
    %v1572 = vpack.c.b16 %v1464, %v1460
    %v1573 = vpack.c.b16 %v1465, %v1461
    %v1574 = vpack.c.b16 %v1466, %v1462
    %v1575 = vpack.c.b16 %v1471, %v1467
    %v1576 = vpack.c.b16 %v1472, %v1468
    %v1577 = vpack.c.b16 %v1473, %v1469
    %v1578 = vpack.c.b16 %v1474, %v1470
    %v1579 = vpack.c.b16 %v1479, %v1475
    %v1580 = vpack.c.b16 %v1480, %v1476
    %v1581 = vpack.c.b16 %v1481, %v1477
    %v1582 = vpack.c.b16 %v1482, %v1478
    %v1583 = vpack.c.b16 %v1487, %v1483
    %v1584 = vpack.c.b16 %v1488, %v1484
    %v1585 = vpack.c.b16 %v1489, %v1485
    %v1586 = vpack.c.b16 %v1490, %v1486
    %v1587 = vpack.c.b16 %v1495, %v1491
    %v1588 = vpack.c.b16 %v1496, %v1492
    %v1589 = vpack.c.b16 %v1497, %v1493
    %v1590 = vpack.c.b16 %v1498, %v1494
    %v1591 = vpack.c.b16 %v1503, %v1499
    %v1592 = vpack.c.b16 %v1504, %v1500
    %v1593 = vpack.c.b16 %v1505, %v1501
    %v1594 = vpack.c.b16 %v1506, %v1502
    %v1595 = vpack.c.b16 %v1511, %v1507
    %v1596 = vpack.c.b16 %v1512, %v1508
    %v1597 = vpack.c.b16 %v1513, %v1509
    %v1598 = vpack.c.b16 %v1514, %v1510
    %v1599 = vpack.c.b16 %v1519, %v1515
    %v1600 = vpack.c.b16 %v1520, %v1516
    %v1601 = vpack.c.b16 %v1521, %v1517
    %v1602 = vpack.c.b16 %v1522, %v1518
    %v1603 = vpack.c.b16 %v1527, %v1523
    %v1604 = vpack.c.b16 %v1528, %v1524
    %v1605 = vpack.c.b16 %v1529, %v1525
    %v1606 = vpack.c.b16 %v1530, %v1526
    %v1607 = vpack.c.b16 %v1535, %v1531
    %v1608 = vpack.c.b16 %v1536, %v1532
    %v1609 = vpack.c.b16 %v1537, %v1533
    %v1610 = vpack.c.b16 %v1538, %v1534
    %v1611 = vpack.c.b16 %v1543, %v1539
    %v1612 = vpack.c.b16 %v1544, %v1540
    %v1613 = vpack.c.b16 %v1545, %v1541
    %v1614 = vpack.c.b16 %v1546, %v1542
    %v1615 = vpack.c.b16 %v1551, %v1547
    %v1616 = vpack.c.b16 %v1552, %v1548
    %v1617 = vpack.c.b16 %v1553, %v1549
    %v1618 = vpack.c.b16 %v1554, %v1550
    %1683 = vmatprep.subr.bf16.mxu0 %v1584
    %1684 = vmatpush1.bf16.msra.mxu0 %v1583
    %1685 = vmatprep.subr.bf16.mxu0 %v1580
    %1686 = vmatpush1.bf16.msra.mxu0 %v1579
    %1687 = vmatprep.subr.bf16.mxu0 %v1576
    %1688 = vmatpush1.bf16.msra.mxu0 %v1575
    %1689 = vmatprep.subr.bf16.mxu0 %v1572
    %1690 = vmatpush1.bf16.msra.mxu0 %v1571
    %1691 = vmatprep.subr.bf16.mxu0 %v1568
    %1692 = vmatpush1.bf16.msra.mxu0 %v1567
    %1693 = vmatprep.subr.bf16.mxu0 %v1564
    %1694 = vmatpush1.bf16.msra.mxu0 %v1563
    %1695 = vmatprep.subr.bf16.mxu0 %v1560
    %1696 = vmatpush1.bf16.msra.mxu0 %v1559
    %1697 = vmatprep.subr.bf16.mxu0 %v1556
    %1698 = vmatpush1.bf16.msra.mxu0 %v1555
    %1699 = vmatprep.subr.bf16.mxu0 %v1616
    %1700 = vmatpush2.bf16.msra.mxu0 %v1615
    %1701 = vmatprep.subr.bf16.mxu0 %v1612
    %1702 = vmatpush2.bf16.msra.mxu0 %v1611
    %1703 = vmatprep.subr.bf16.mxu0 %v1608
    %1704 = vmatpush2.bf16.msra.mxu0 %v1607
    %1705 = vmatprep.subr.bf16.mxu0 %v1604
    %1706 = vmatpush2.bf16.msra.mxu0 %v1603
    %1707 = vmatprep.subr.bf16.mxu0 %v1600
    %1708 = vmatpush2.bf16.msra.mxu0 %v1599
    %1709 = vmatprep.subr.bf16.mxu0 %v1596
    %1710 = vmatpush2.bf16.msra.mxu0 %v1595
    %1711 = vmatprep.subr.bf16.mxu0 %v1592
    %1712 = vmatpush2.bf16.msra.mxu0 %v1591
    %1713 = vmatprep.subr.bf16.mxu0 %v1588
    %1714 = vmatpush2.bf16.msra.mxu0 %v1587
    %1715 = vmatprep.mubr.bf16.mxu0 %v1190
    %1716 = vmatmul.mubr.bf16.gmra.mxu0 %v1298
    %v1717 = vpop.f32.mrf.mxu0
    %v1718 = vadd.f32 %v84, %v1717
    %v1719 = vpop.f32.mrf.mxu0
    %v1720 = vadd.f32 %v88, %v1719
    %v1721 = vpop.f32.mrf.mxu0
    %v1722 = vpop.f32.mrf.mxu0
    %1723 = vdwg.mxu0
    %1724 = vmatprep.subr.bf16.mxu0 %v1586
    %1725 = vmatpush1.bf16.msra.mxu0 %v1585
    %1726 = vmatprep.subr.bf16.mxu0 %v1582
    %1727 = vmatpush1.bf16.msra.mxu0 %v1581
    %1728 = vmatprep.subr.bf16.mxu0 %v1578
    %1729 = vmatpush1.bf16.msra.mxu0 %v1577
    %1730 = vmatprep.subr.bf16.mxu0 %v1574
    %1731 = vmatpush1.bf16.msra.mxu0 %v1573
    %1732 = vmatprep.subr.bf16.mxu0 %v1570
    %1733 = vmatpush1.bf16.msra.mxu0 %v1569
    %1734 = vmatprep.subr.bf16.mxu0 %v1566
    %1735 = vmatpush1.bf16.msra.mxu0 %v1565
    %1736 = vmatprep.subr.bf16.mxu0 %v1562
    %1737 = vmatpush1.bf16.msra.mxu0 %v1561
    %1738 = vmatprep.subr.bf16.mxu0 %v1558
    %1739 = vmatpush1.bf16.msra.mxu0 %v1557
    %1740 = vmatprep.subr.bf16.mxu0 %v1618
    %1741 = vmatpush2.bf16.msra.mxu0 %v1617
    %1742 = vmatprep.subr.bf16.mxu0 %v1614
    %1743 = vmatpush2.bf16.msra.mxu0 %v1613
    %1744 = vmatprep.subr.bf16.mxu0 %v1610
    %1745 = vmatpush2.bf16.msra.mxu0 %v1609
    %1746 = vmatprep.subr.bf16.mxu0 %v1606
    %1747 = vmatpush2.bf16.msra.mxu0 %v1605
    %1748 = vmatprep.subr.bf16.mxu0 %v1602
    %1749 = vmatpush2.bf16.msra.mxu0 %v1601
    %1750 = vmatprep.subr.bf16.mxu0 %v1598
    %1751 = vmatpush2.bf16.msra.mxu0 %v1597
    %1752 = vmatprep.subr.bf16.mxu0 %v1594
    %1753 = vmatpush2.bf16.msra.mxu0 %v1593
    %1754 = vmatprep.subr.bf16.mxu0 %v1590
    %1755 = vmatpush2.bf16.msra.mxu0 %v1589
    %1756 = vmatprep.mubr.bf16.mxu0 %v1190
    %1757 = vmatmul.mubr.bf16.gmra.mxu0 %v1298
    %v1758 = vpop.f32.mrf.mxu0
    %v1759 = vadd.f32 %v92, %v1758
    %v1760 = vpop.f32.mrf.mxu0
    %v1761 = vadd.f32 %v96, %v1760
    %v1762 = vpop.f32.mrf.mxu0
    %v1763 = vpop.f32.mrf.mxu0
    %1764 = vdwg.mxu0
    %v1765 = vxor.u32 %v1718, 2147483648
    %v1766 = vmul.f32 %v1765, 1.442695
    %v1767 = vpow.pop %v1766
    %v1768 = vadd.f32 %v1767, 1.0
    %v1769 = vrcp.pop %v1768
    %v1770 = vmul.f32 1.0, %v1769
    %v1771 = vxor.u32 %v1720, 2147483648
    %v1772 = vmul.f32 %v1771, 1.442695
    %v1773 = vpow.pop %v1772
    %v1774 = vadd.f32 %v1773, 1.0
    %v1775 = vrcp.pop %v1774
    %v1776 = vmul.f32 1.0, %v1775
    %v1777 = vmul.f32 %v1770, %v1761
    %v1778 = vadd.f32 %v1759, %v1777
    %v1779 = vtanh.pop %v1778
    %v1780 = vsub.f32 1.0, %v1776
    %v1781 = vmul.f32 %v1780, %v1779
    %v1782 = vmul.f32 %v1776, %v1189
    %v1783 = vadd.f32 %v1781, %v1782
    %v1784 = vpack.c.bf16 %v1783, %v1783
    %v1785 = vld [vmem:[#allocation8] sm:$0xf]
    %v1786 = vld [vmem:[#allocation8 + $0x4] sm:$0xf]
    %v1787 = vld [vmem:[#allocation8 + $0x8] sm:$0xf]
    %v1788 = vld [vmem:[#allocation8 + $0xc] sm:$0xf]
    %v1789 = vld [vmem:[#allocation8 + $0x10] sm:$0xf]
    %v1790 = vld [vmem:[#allocation8 + $0x14] sm:$0xf]
    %v1791 = vld [vmem:[#allocation8 + $0x18] sm:$0xf]
    %v1792 = vld [vmem:[#allocation8 + $0x1c] sm:$0xf]
    %v1793 = vld [vmem:[#allocation8 + $0x20] sm:$0xf]
    %v1794 = vld [vmem:[#allocation8 + $0x24] sm:$0xf]
    %v1795 = vld [vmem:[#allocation8 + $0x28] sm:$0xf]
    %v1796 = vld [vmem:[#allocation8 + $0x2c] sm:$0xf]
    %v1797 = vld [vmem:[#allocation8 + $0x30] sm:$0xf]
    %v1798 = vld [vmem:[#allocation8 + $0x34] sm:$0xf]
    %v1799 = vld [vmem:[#allocation8 + $0x38] sm:$0xf]
    %v1800 = vld [vmem:[#allocation8 + $0x3c] sm:$0xf]
    %v1817 = vunpack.c.l.b16 %v1785
    %v1818 = vunpack.c.l.b16 %v1786
    %v1819 = vunpack.c.l.b16 %v1787
    %v1820 = vunpack.c.l.b16 %v1788
    %v1821 = vunpack.c.l.b16 %v1789
    %v1822 = vunpack.c.l.b16 %v1790
    %v1823 = vunpack.c.l.b16 %v1791
    %v1824 = vunpack.c.l.b16 %v1792
    %v1825 = vunpack.c.l.b16 %v1793
    %v1826 = vunpack.c.l.b16 %v1794
    %v1827 = vunpack.c.l.b16 %v1795
    %v1828 = vunpack.c.l.b16 %v1796
    %v1829 = vunpack.c.l.b16 %v1797
    %v1830 = vunpack.c.l.b16 %v1798
    %v1831 = vunpack.c.l.b16 %v1799
    %v1832 = vunpack.c.l.b16 %v1800
    %v1833 = vpack.c.b16 %v1818, %v1817
    %v1834 = vpack.c.b16 %v1820, %v1819
    %v1835 = vpack.c.b16 %v1822, %v1821
    %v1836 = vpack.c.b16 %v1824, %v1823
    %v1837 = vpack.c.b16 %v1826, %v1825
    %v1838 = vpack.c.b16 %v1828, %v1827
    %v1839 = vpack.c.b16 %v1830, %v1829
    %v1840 = vpack.c.b16 %v1832, %v1831
    %1849 = vmatprep.subr.bf16.mxu0 0
    %1850 = vmatpush1.bf16.msra.mxu0 %v1840
    %1851 = vmatprep.subr.bf16.mxu0 0
    %1852 = vmatpush1.bf16.msra.mxu0 %v1839
    %1853 = vmatprep.subr.bf16.mxu0 0
    %1854 = vmatpush1.bf16.msra.mxu0 %v1838
    %1855 = vmatprep.subr.bf16.mxu0 0
    %1856 = vmatpush1.bf16.msra.mxu0 %v1837
    %1857 = vmatprep.subr.bf16.mxu0 0
    %1858 = vmatpush1.bf16.msra.mxu0 %v1836
    %1859 = vmatprep.subr.bf16.mxu0 0
    %1860 = vmatpush1.bf16.msra.mxu0 %v1835
    %1861 = vmatprep.subr.bf16.mxu0 0
    %1862 = vmatpush1.bf16.msra.mxu0 %v1834
    %1863 = vmatprep.subr.bf16.mxu0 0
    %1864 = vmatpush1.bf16.msra.mxu0 %v1833
    %1865 = vmatprep.subr.bf16.mxu0 0
    %1866 = vmatpush2.bf16.msra.mxu0 0
    %1867 = vmatprep.subr.bf16.mxu0 0
    %1868 = vmatpush2.bf16.msra.mxu0 0
    %1869 = vmatprep.subr.bf16.mxu0 0
    %1870 = vmatpush2.bf16.msra.mxu0 0
    %1871 = vmatprep.subr.bf16.mxu0 0
    %1872 = vmatpush2.bf16.msra.mxu0 0
    %1873 = vmatprep.subr.bf16.mxu0 0
    %1874 = vmatpush2.bf16.msra.mxu0 0
    %1875 = vmatprep.subr.bf16.mxu0 0
    %1876 = vmatpush2.bf16.msra.mxu0 0
    %1877 = vmatprep.subr.bf16.mxu0 0
    %1878 = vmatpush2.bf16.msra.mxu0 0
    %1879 = vmatprep.subr.bf16.mxu0 0
    %1880 = vmatpush2.bf16.msra.mxu0 0
    %1881 = vmatprep.mubr.bf16.mxu0 0
    %1882 = vmatmul.mubr.bf16.gmra.mxu0 %v1784
    %v1883 = vpop.f32.mrf.mxu0
    %v1884 = vadd.f32 %v106, %v1883
    %v1885 = vpop.f32.mrf.mxu0
    %v1886 = vpop.f32.mrf.mxu0
    %v1887 = vpop.f32.mrf.mxu0
    %1888 = vdwg.mxu0
    %v1889 = vadd.f32 %v1884, %v1295
    %s1890 = scalar_lea.vmem [#allocation10], 16
    %1891 = vst [vmem:[%s1890] sm:$0xff] %v1889
    %v1892 = vpack.c.bf16 %v1889, %v1889
    %v1893 = vld [vmem:[#allocation7] sm:$0xff]
    %v1894 = vld [vmem:[#allocation7 + $0x8] sm:$0xff]
    %v1895 = vld [vmem:[#allocation7 + $0x10] sm:$0xff]
    %v1896 = vld [vmem:[#allocation7 + $0x18] sm:$0xff]
    %v1897 = vld [vmem:[#allocation7 + $0x20] sm:$0xff]
    %v1898 = vld [vmem:[#allocation7 + $0x28] sm:$0xff]
    %v1899 = vld [vmem:[#allocation7 + $0x30] sm:$0xff]
    %v1900 = vld [vmem:[#allocation7 + $0x38] sm:$0xff]
    %v1901 = vld [vmem:[#allocation7 + $0x40] sm:$0xff]
    %v1902 = vld [vmem:[#allocation7 + $0x48] sm:$0xff]
    %v1903 = vld [vmem:[#allocation7 + $0x50] sm:$0xff]
    %v1904 = vld [vmem:[#allocation7 + $0x58] sm:$0xff]
    %v1905 = vld [vmem:[#allocation7 + $0x60] sm:$0xff]
    %v1906 = vld [vmem:[#allocation7 + $0x68] sm:$0xff]
    %v1907 = vld [vmem:[#allocation7 + $0x70] sm:$0xff]
    %v1908 = vld [vmem:[#allocation7 + $0x78] sm:$0xff]
    %v1909 = vld [vmem:[#allocation7 + $0x80] sm:$0xff]
    %v1910 = vld [vmem:[#allocation7 + $0x88] sm:$0xff]
    %v1911 = vld [vmem:[#allocation7 + $0x90] sm:$0xff]
    %v1912 = vld [vmem:[#allocation7 + $0x98] sm:$0xff]
    %v1913 = vld [vmem:[#allocation7 + $0xa0] sm:$0xff]
    %v1914 = vld [vmem:[#allocation7 + $0xa8] sm:$0xff]
    %v1915 = vld [vmem:[#allocation7 + $0xb0] sm:$0xff]
    %v1916 = vld [vmem:[#allocation7 + $0xb8] sm:$0xff]
    %v1917 = vld [vmem:[#allocation7 + $0xc0] sm:$0xff]
    %v1918 = vld [vmem:[#allocation7 + $0xc8] sm:$0xff]
    %v1919 = vld [vmem:[#allocation7 + $0xd0] sm:$0xff]
    %v1920 = vld [vmem:[#allocation7 + $0xd8] sm:$0xff]
    %v1921 = vld [vmem:[#allocation7 + $0xe0] sm:$0xff]
    %v1922 = vld [vmem:[#allocation7 + $0xe8] sm:$0xff]
    %v1923 = vld [vmem:[#allocation7 + $0xf0] sm:$0xff]
    %v1924 = vld [vmem:[#allocation7 + $0xf8] sm:$0xff]
    %v1925 = vld [vmem:[#allocation7 + $0x100] sm:$0xff]
    %v1926 = vld [vmem:[#allocation7 + $0x108] sm:$0xff]
    %v1927 = vld [vmem:[#allocation7 + $0x110] sm:$0xff]
    %v1928 = vld [vmem:[#allocation7 + $0x118] sm:$0xff]
    %v1929 = vld [vmem:[#allocation7 + $0x120] sm:$0xff]
    %v1930 = vld [vmem:[#allocation7 + $0x128] sm:$0xff]
    %v1931 = vld [vmem:[#allocation7 + $0x130] sm:$0xff]
    %v1932 = vld [vmem:[#allocation7 + $0x138] sm:$0xff]
    %v1933 = vld [vmem:[#allocation7 + $0x140] sm:$0xff]
    %v1934 = vld [vmem:[#allocation7 + $0x148] sm:$0xff]
    %v1935 = vld [vmem:[#allocation7 + $0x150] sm:$0xff]
    %v1936 = vld [vmem:[#allocation7 + $0x158] sm:$0xff]
    %v1937 = vld [vmem:[#allocation7 + $0x160] sm:$0xff]
    %v1938 = vld [vmem:[#allocation7 + $0x168] sm:$0xff]
    %v1939 = vld [vmem:[#allocation7 + $0x170] sm:$0xff]
    %v1940 = vld [vmem:[#allocation7 + $0x178] sm:$0xff]
    %v1941 = vld [vmem:[#allocation7 + $0x180] sm:$0xff]
    %v1942 = vld [vmem:[#allocation7 + $0x188] sm:$0xff]
    %v1943 = vld [vmem:[#allocation7 + $0x190] sm:$0xff]
    %v1944 = vld [vmem:[#allocation7 + $0x198] sm:$0xff]
    %v1945 = vld [vmem:[#allocation7 + $0x1a0] sm:$0xff]
    %v1946 = vld [vmem:[#allocation7 + $0x1a8] sm:$0xff]
    %v1947 = vld [vmem:[#allocation7 + $0x1b0] sm:$0xff]
    %v1948 = vld [vmem:[#allocation7 + $0x1b8] sm:$0xff]
    %v1949 = vld [vmem:[#allocation7 + $0x1c0] sm:$0xff]
    %v1950 = vld [vmem:[#allocation7 + $0x1c8] sm:$0xff]
    %v1951 = vld [vmem:[#allocation7 + $0x1d0] sm:$0xff]
    %v1952 = vld [vmem:[#allocation7 + $0x1d8] sm:$0xff]
    %v1953 = vld [vmem:[#allocation7 + $0x1e0] sm:$0xff]
    %v1954 = vld [vmem:[#allocation7 + $0x1e8] sm:$0xff]
    %v1955 = vld [vmem:[#allocation7 + $0x1f0] sm:$0xff]
    %v1956 = vld [vmem:[#allocation7 + $0x1f8] sm:$0xff]
    %v2021 = vunpack.c.l.b16 %v1893
    %v2022 = vunpack.c.h.b16 %v1893
    %v2023 = vunpack.c.l.b16 %v1894
    %v2024 = vunpack.c.h.b16 %v1894
    %v2025 = vunpack.c.l.b16 %v1895
    %v2026 = vunpack.c.h.b16 %v1895
    %v2027 = vunpack.c.l.b16 %v1896
    %v2028 = vunpack.c.h.b16 %v1896
    %v2029 = vunpack.c.l.b16 %v1897
    %v2030 = vunpack.c.h.b16 %v1897
    %v2031 = vunpack.c.l.b16 %v1898
    %v2032 = vunpack.c.h.b16 %v1898
    %v2033 = vunpack.c.l.b16 %v1899
    %v2034 = vunpack.c.h.b16 %v1899
    %v2035 = vunpack.c.l.b16 %v1900
    %v2036 = vunpack.c.h.b16 %v1900
    %v2037 = vunpack.c.l.b16 %v1901
    %v2038 = vunpack.c.h.b16 %v1901
    %v2039 = vunpack.c.l.b16 %v1902
    %v2040 = vunpack.c.h.b16 %v1902
    %v2041 = vunpack.c.l.b16 %v1903
    %v2042 = vunpack.c.h.b16 %v1903
    %v2043 = vunpack.c.l.b16 %v1904
    %v2044 = vunpack.c.h.b16 %v1904
    %v2045 = vunpack.c.l.b16 %v1905
    %v2046 = vunpack.c.h.b16 %v1905
    %v2047 = vunpack.c.l.b16 %v1906
    %v2048 = vunpack.c.h.b16 %v1906
    %v2049 = vunpack.c.l.b16 %v1907
    %v2050 = vunpack.c.h.b16 %v1907
    %v2051 = vunpack.c.l.b16 %v1908
    %v2052 = vunpack.c.h.b16 %v1908
    %v2053 = vunpack.c.l.b16 %v1909
    %v2054 = vunpack.c.h.b16 %v1909
    %v2055 = vunpack.c.l.b16 %v1910
    %v2056 = vunpack.c.h.b16 %v1910
    %v2057 = vunpack.c.l.b16 %v1911
    %v2058 = vunpack.c.h.b16 %v1911
    %v2059 = vunpack.c.l.b16 %v1912
    %v2060 = vunpack.c.h.b16 %v1912
    %v2061 = vunpack.c.l.b16 %v1913
    %v2062 = vunpack.c.h.b16 %v1913
    %v2063 = vunpack.c.l.b16 %v1914
    %v2064 = vunpack.c.h.b16 %v1914
    %v2065 = vunpack.c.l.b16 %v1915
    %v2066 = vunpack.c.h.b16 %v1915
    %v2067 = vunpack.c.l.b16 %v1916
    %v2068 = vunpack.c.h.b16 %v1916
    %v2069 = vunpack.c.l.b16 %v1917
    %v2070 = vunpack.c.h.b16 %v1917
    %v2071 = vunpack.c.l.b16 %v1918
    %v2072 = vunpack.c.h.b16 %v1918
    %v2073 = vunpack.c.l.b16 %v1919
    %v2074 = vunpack.c.h.b16 %v1919
    %v2075 = vunpack.c.l.b16 %v1920
    %v2076 = vunpack.c.h.b16 %v1920
    %v2077 = vunpack.c.l.b16 %v1921
    %v2078 = vunpack.c.h.b16 %v1921
    %v2079 = vunpack.c.l.b16 %v1922
    %v2080 = vunpack.c.h.b16 %v1922
    %v2081 = vunpack.c.l.b16 %v1923
    %v2082 = vunpack.c.h.b16 %v1923
    %v2083 = vunpack.c.l.b16 %v1924
    %v2084 = vunpack.c.h.b16 %v1924
    %v2085 = vunpack.c.l.b16 %v1925
    %v2086 = vunpack.c.h.b16 %v1925
    %v2087 = vunpack.c.l.b16 %v1926
    %v2088 = vunpack.c.h.b16 %v1926
    %v2089 = vunpack.c.l.b16 %v1927
    %v2090 = vunpack.c.h.b16 %v1927
    %v2091 = vunpack.c.l.b16 %v1928
    %v2092 = vunpack.c.h.b16 %v1928
    %v2093 = vunpack.c.l.b16 %v1929
    %v2094 = vunpack.c.h.b16 %v1929
    %v2095 = vunpack.c.l.b16 %v1930
    %v2096 = vunpack.c.h.b16 %v1930
    %v2097 = vunpack.c.l.b16 %v1931
    %v2098 = vunpack.c.h.b16 %v1931
    %v2099 = vunpack.c.l.b16 %v1932
    %v2100 = vunpack.c.h.b16 %v1932
    %v2101 = vunpack.c.l.b16 %v1933
    %v2102 = vunpack.c.h.b16 %v1933
    %v2103 = vunpack.c.l.b16 %v1934
    %v2104 = vunpack.c.h.b16 %v1934
    %v2105 = vunpack.c.l.b16 %v1935
    %v2106 = vunpack.c.h.b16 %v1935
    %v2107 = vunpack.c.l.b16 %v1936
    %v2108 = vunpack.c.h.b16 %v1936
    %v2109 = vunpack.c.l.b16 %v1937
    %v2110 = vunpack.c.h.b16 %v1937
    %v2111 = vunpack.c.l.b16 %v1938
    %v2112 = vunpack.c.h.b16 %v1938
    %v2113 = vunpack.c.l.b16 %v1939
    %v2114 = vunpack.c.h.b16 %v1939
    %v2115 = vunpack.c.l.b16 %v1940
    %v2116 = vunpack.c.h.b16 %v1940
    %v2117 = vunpack.c.l.b16 %v1941
    %v2118 = vunpack.c.h.b16 %v1941
    %v2119 = vunpack.c.l.b16 %v1942
    %v2120 = vunpack.c.h.b16 %v1942
    %v2121 = vunpack.c.l.b16 %v1943
    %v2122 = vunpack.c.h.b16 %v1943
    %v2123 = vunpack.c.l.b16 %v1944
    %v2124 = vunpack.c.h.b16 %v1944
    %v2125 = vunpack.c.l.b16 %v1945
    %v2126 = vunpack.c.h.b16 %v1945
    %v2127 = vunpack.c.l.b16 %v1946
    %v2128 = vunpack.c.h.b16 %v1946
    %v2129 = vunpack.c.l.b16 %v1947
    %v2130 = vunpack.c.h.b16 %v1947
    %v2131 = vunpack.c.l.b16 %v1948
    %v2132 = vunpack.c.h.b16 %v1948
    %v2133 = vunpack.c.l.b16 %v1949
    %v2134 = vunpack.c.h.b16 %v1949
    %v2135 = vunpack.c.l.b16 %v1950
    %v2136 = vunpack.c.h.b16 %v1950
    %v2137 = vunpack.c.l.b16 %v1951
    %v2138 = vunpack.c.h.b16 %v1951
    %v2139 = vunpack.c.l.b16 %v1952
    %v2140 = vunpack.c.h.b16 %v1952
    %v2141 = vunpack.c.l.b16 %v1953
    %v2142 = vunpack.c.h.b16 %v1953
    %v2143 = vunpack.c.l.b16 %v1954
    %v2144 = vunpack.c.h.b16 %v1954
    %v2145 = vunpack.c.l.b16 %v1955
    %v2146 = vunpack.c.h.b16 %v1955
    %v2147 = vunpack.c.l.b16 %v1956
    %v2148 = vunpack.c.h.b16 %v1956
    %v2149 = vpack.c.b16 %v2025, %v2021
    %v2150 = vpack.c.b16 %v2026, %v2022
    %v2151 = vpack.c.b16 %v2027, %v2023
    %v2152 = vpack.c.b16 %v2028, %v2024
    %v2153 = vpack.c.b16 %v2033, %v2029
    %v2154 = vpack.c.b16 %v2034, %v2030
    %v2155 = vpack.c.b16 %v2035, %v2031
    %v2156 = vpack.c.b16 %v2036, %v2032
    %v2157 = vpack.c.b16 %v2041, %v2037
    %v2158 = vpack.c.b16 %v2042, %v2038
    %v2159 = vpack.c.b16 %v2043, %v2039
    %v2160 = vpack.c.b16 %v2044, %v2040
    %v2161 = vpack.c.b16 %v2049, %v2045
    %v2162 = vpack.c.b16 %v2050, %v2046
    %v2163 = vpack.c.b16 %v2051, %v2047
    %v2164 = vpack.c.b16 %v2052, %v2048
    %v2165 = vpack.c.b16 %v2057, %v2053
    %v2166 = vpack.c.b16 %v2058, %v2054
    %v2167 = vpack.c.b16 %v2059, %v2055
    %v2168 = vpack.c.b16 %v2060, %v2056
    %v2169 = vpack.c.b16 %v2065, %v2061
    %v2170 = vpack.c.b16 %v2066, %v2062
    %v2171 = vpack.c.b16 %v2067, %v2063
    %v2172 = vpack.c.b16 %v2068, %v2064
    %v2173 = vpack.c.b16 %v2073, %v2069
    %v2174 = vpack.c.b16 %v2074, %v2070
    %v2175 = vpack.c.b16 %v2075, %v2071
    %v2176 = vpack.c.b16 %v2076, %v2072
    %v2177 = vpack.c.b16 %v2081, %v2077
    %v2178 = vpack.c.b16 %v2082, %v2078
    %v2179 = vpack.c.b16 %v2083, %v2079
    %v2180 = vpack.c.b16 %v2084, %v2080
    %v2181 = vpack.c.b16 %v2089, %v2085
    %v2182 = vpack.c.b16 %v2090, %v2086
    %v2183 = vpack.c.b16 %v2091, %v2087
    %v2184 = vpack.c.b16 %v2092, %v2088
    %v2185 = vpack.c.b16 %v2097, %v2093
    %v2186 = vpack.c.b16 %v2098, %v2094
    %v2187 = vpack.c.b16 %v2099, %v2095
    %v2188 = vpack.c.b16 %v2100, %v2096
    %v2189 = vpack.c.b16 %v2105, %v2101
    %v2190 = vpack.c.b16 %v2106, %v2102
    %v2191 = vpack.c.b16 %v2107, %v2103
    %v2192 = vpack.c.b16 %v2108, %v2104
    %v2193 = vpack.c.b16 %v2113, %v2109
    %v2194 = vpack.c.b16 %v2114, %v2110
    %v2195 = vpack.c.b16 %v2115, %v2111
    %v2196 = vpack.c.b16 %v2116, %v2112
    %v2197 = vpack.c.b16 %v2121, %v2117
    %v2198 = vpack.c.b16 %v2122, %v2118
    %v2199 = vpack.c.b16 %v2123, %v2119
    %v2200 = vpack.c.b16 %v2124, %v2120
    %v2201 = vpack.c.b16 %v2129, %v2125
    %v2202 = vpack.c.b16 %v2130, %v2126
    %v2203 = vpack.c.b16 %v2131, %v2127
    %v2204 = vpack.c.b16 %v2132, %v2128
    %v2205 = vpack.c.b16 %v2137, %v2133
    %v2206 = vpack.c.b16 %v2138, %v2134
    %v2207 = vpack.c.b16 %v2139, %v2135
    %v2208 = vpack.c.b16 %v2140, %v2136
    %v2209 = vpack.c.b16 %v2145, %v2141
    %v2210 = vpack.c.b16 %v2146, %v2142
    %v2211 = vpack.c.b16 %v2147, %v2143
    %v2212 = vpack.c.b16 %v2148, %v2144
    %2277 = vmatprep.subr.bf16.mxu0 %v2178
    %2278 = vmatpush1.bf16.msra.mxu0 %v2177
    %2279 = vmatprep.subr.bf16.mxu0 %v2174
    %2280 = vmatpush1.bf16.msra.mxu0 %v2173
    %2281 = vmatprep.subr.bf16.mxu0 %v2170
    %2282 = vmatpush1.bf16.msra.mxu0 %v2169
    %2283 = vmatprep.subr.bf16.mxu0 %v2166
    %2284 = vmatpush1.bf16.msra.mxu0 %v2165
    %2285 = vmatprep.subr.bf16.mxu0 %v2162
    %2286 = vmatpush1.bf16.msra.mxu0 %v2161
    %2287 = vmatprep.subr.bf16.mxu0 %v2158
    %2288 = vmatpush1.bf16.msra.mxu0 %v2157
    %2289 = vmatprep.subr.bf16.mxu0 %v2154
    %2290 = vmatpush1.bf16.msra.mxu0 %v2153
    %2291 = vmatprep.subr.bf16.mxu0 %v2150
    %2292 = vmatpush1.bf16.msra.mxu0 %v2149
    %2293 = vmatprep.subr.bf16.mxu0 %v2210
    %2294 = vmatpush2.bf16.msra.mxu0 %v2209
    %2295 = vmatprep.subr.bf16.mxu0 %v2206
    %2296 = vmatpush2.bf16.msra.mxu0 %v2205
    %2297 = vmatprep.subr.bf16.mxu0 %v2202
    %2298 = vmatpush2.bf16.msra.mxu0 %v2201
    %2299 = vmatprep.subr.bf16.mxu0 %v2198
    %2300 = vmatpush2.bf16.msra.mxu0 %v2197
    %2301 = vmatprep.subr.bf16.mxu0 %v2194
    %2302 = vmatpush2.bf16.msra.mxu0 %v2193
    %2303 = vmatprep.subr.bf16.mxu0 %v2190
    %2304 = vmatpush2.bf16.msra.mxu0 %v2189
    %2305 = vmatprep.subr.bf16.mxu0 %v2186
    %2306 = vmatpush2.bf16.msra.mxu0 %v2185
    %2307 = vmatprep.subr.bf16.mxu0 %v2182
    %2308 = vmatpush2.bf16.msra.mxu0 %v2181
    %2309 = vmatprep.mubr.bf16.mxu0 %v1784
    %2310 = vmatmul.mubr.bf16.gmra.mxu0 %v1892
    %v2311 = vpop.f32.mrf.mxu0
    %v2312 = vadd.f32 %v84, %v2311
    %v2313 = vpop.f32.mrf.mxu0
    %v2314 = vadd.f32 %v88, %v2313
    %v2315 = vpop.f32.mrf.mxu0
    %v2316 = vpop.f32.mrf.mxu0
    %2317 = vdwg.mxu0
    %2318 = vmatprep.subr.bf16.mxu0 %v2180
    %2319 = vmatpush1.bf16.msra.mxu0 %v2179
    %2320 = vmatprep.subr.bf16.mxu0 %v2176
    %2321 = vmatpush1.bf16.msra.mxu0 %v2175
    %2322 = vmatprep.subr.bf16.mxu0 %v2172
    %2323 = vmatpush1.bf16.msra.mxu0 %v2171
    %2324 = vmatprep.subr.bf16.mxu0 %v2168
    %2325 = vmatpush1.bf16.msra.mxu0 %v2167
    %2326 = vmatprep.subr.bf16.mxu0 %v2164
    %2327 = vmatpush1.bf16.msra.mxu0 %v2163
    %2328 = vmatprep.subr.bf16.mxu0 %v2160
    %2329 = vmatpush1.bf16.msra.mxu0 %v2159
    %2330 = vmatprep.subr.bf16.mxu0 %v2156
    %2331 = vmatpush1.bf16.msra.mxu0 %v2155
    %2332 = vmatprep.subr.bf16.mxu0 %v2152
    %2333 = vmatpush1.bf16.msra.mxu0 %v2151
    %2334 = vmatprep.subr.bf16.mxu0 %v2212
    %2335 = vmatpush2.bf16.msra.mxu0 %v2211
    %2336 = vmatprep.subr.bf16.mxu0 %v2208
    %2337 = vmatpush2.bf16.msra.mxu0 %v2207
    %2338 = vmatprep.subr.bf16.mxu0 %v2204
    %2339 = vmatpush2.bf16.msra.mxu0 %v2203
    %2340 = vmatprep.subr.bf16.mxu0 %v2200
    %2341 = vmatpush2.bf16.msra.mxu0 %v2199
    %2342 = vmatprep.subr.bf16.mxu0 %v2196
    %2343 = vmatpush2.bf16.msra.mxu0 %v2195
    %2344 = vmatprep.subr.bf16.mxu0 %v2192
    %2345 = vmatpush2.bf16.msra.mxu0 %v2191
    %2346 = vmatprep.subr.bf16.mxu0 %v2188
    %2347 = vmatpush2.bf16.msra.mxu0 %v2187
    %2348 = vmatprep.subr.bf16.mxu0 %v2184
    %2349 = vmatpush2.bf16.msra.mxu0 %v2183
    %2350 = vmatprep.mubr.bf16.mxu0 %v1784
    %2351 = vmatmul.mubr.bf16.gmra.mxu0 %v1892
    %v2352 = vpop.f32.mrf.mxu0
    %v2353 = vadd.f32 %v92, %v2352
    %v2354 = vpop.f32.mrf.mxu0
    %v2355 = vadd.f32 %v96, %v2354
    %v2356 = vpop.f32.mrf.mxu0
    %v2357 = vpop.f32.mrf.mxu0
    %2358 = vdwg.mxu0
    %v2359 = vxor.u32 %v2312, 2147483648
    %v2360 = vmul.f32 %v2359, 1.442695
    %v2361 = vpow.pop %v2360
    %v2362 = vadd.f32 %v2361, 1.0
    %v2363 = vrcp.pop %v2362
    %v2364 = vmul.f32 1.0, %v2363
    %v2365 = vxor.u32 %v2314, 2147483648
    %v2366 = vmul.f32 %v2365, 1.442695
    %v2367 = vpow.pop %v2366
    %v2368 = vadd.f32 %v2367, 1.0
    %v2369 = vrcp.pop %v2368
    %v2370 = vmul.f32 1.0, %v2369
    %v2371 = vmul.f32 %v2364, %v2355
    %v2372 = vadd.f32 %v2353, %v2371
    %v2373 = vtanh.pop %v2372
    %v2374 = vsub.f32 1.0, %v2370
    %v2375 = vmul.f32 %v2374, %v2373
    %v2376 = vmul.f32 %v2370, %v1783
    %v2377 = vadd.f32 %v2375, %v2376
    %v2378 = vpack.c.bf16 %v2377, %v2377
    %v2379 = vld [vmem:[#allocation8] sm:$0xf]
    %v2380 = vld [vmem:[#allocation8 + $0x4] sm:$0xf]
    %v2381 = vld [vmem:[#allocation8 + $0x8] sm:$0xf]
    %v2382 = vld [vmem:[#allocation8 + $0xc] sm:$0xf]
    %v2383 = vld [vmem:[#allocation8 + $0x10] sm:$0xf]
    %v2384 = vld [vmem:[#allocation8 + $0x14] sm:$0xf]
    %v2385 = vld [vmem:[#allocation8 + $0x18] sm:$0xf]
    %v2386 = vld [vmem:[#allocation8 + $0x1c] sm:$0xf]
    %v2387 = vld [vmem:[#allocation8 + $0x20] sm:$0xf]
    %v2388 = vld [vmem:[#allocation8 + $0x24] sm:$0xf]
    %v2389 = vld [vmem:[#allocation8 + $0x28] sm:$0xf]
    %v2390 = vld [vmem:[#allocation8 + $0x2c] sm:$0xf]
    %v2391 = vld [vmem:[#allocation8 + $0x30] sm:$0xf]
    %v2392 = vld [vmem:[#allocation8 + $0x34] sm:$0xf]
    %v2393 = vld [vmem:[#allocation8 + $0x38] sm:$0xf]
    %v2394 = vld [vmem:[#allocation8 + $0x3c] sm:$0xf]
    %v2411 = vunpack.c.l.b16 %v2379
    %v2412 = vunpack.c.l.b16 %v2380
    %v2413 = vunpack.c.l.b16 %v2381
    %v2414 = vunpack.c.l.b16 %v2382
    %v2415 = vunpack.c.l.b16 %v2383
    %v2416 = vunpack.c.l.b16 %v2384
    %v2417 = vunpack.c.l.b16 %v2385
    %v2418 = vunpack.c.l.b16 %v2386
    %v2419 = vunpack.c.l.b16 %v2387
    %v2420 = vunpack.c.l.b16 %v2388
    %v2421 = vunpack.c.l.b16 %v2389
    %v2422 = vunpack.c.l.b16 %v2390
    %v2423 = vunpack.c.l.b16 %v2391
    %v2424 = vunpack.c.l.b16 %v2392
    %v2425 = vunpack.c.l.b16 %v2393
    %v2426 = vunpack.c.l.b16 %v2394
    %v2427 = vpack.c.b16 %v2412, %v2411
    %v2428 = vpack.c.b16 %v2414, %v2413
    %v2429 = vpack.c.b16 %v2416, %v2415
    %v2430 = vpack.c.b16 %v2418, %v2417
    %v2431 = vpack.c.b16 %v2420, %v2419
    %v2432 = vpack.c.b16 %v2422, %v2421
    %v2433 = vpack.c.b16 %v2424, %v2423
    %v2434 = vpack.c.b16 %v2426, %v2425
    %2443 = vmatprep.subr.bf16.mxu0 0
    %2444 = vmatpush1.bf16.msra.mxu0 %v2434
    %2445 = vmatprep.subr.bf16.mxu0 0
    %2446 = vmatpush1.bf16.msra.mxu0 %v2433
    %2447 = vmatprep.subr.bf16.mxu0 0
    %2448 = vmatpush1.bf16.msra.mxu0 %v2432
    %2449 = vmatprep.subr.bf16.mxu0 0
    %2450 = vmatpush1.bf16.msra.mxu0 %v2431
    %2451 = vmatprep.subr.bf16.mxu0 0
    %2452 = vmatpush1.bf16.msra.mxu0 %v2430
    %2453 = vmatprep.subr.bf16.mxu0 0
    %2454 = vmatpush1.bf16.msra.mxu0 %v2429
    %2455 = vmatprep.subr.bf16.mxu0 0
    %2456 = vmatpush1.bf16.msra.mxu0 %v2428
    %2457 = vmatprep.subr.bf16.mxu0 0
    %2458 = vmatpush1.bf16.msra.mxu0 %v2427
    %2459 = vmatprep.subr.bf16.mxu0 0
    %2460 = vmatpush2.bf16.msra.mxu0 0
    %2461 = vmatprep.subr.bf16.mxu0 0
    %2462 = vmatpush2.bf16.msra.mxu0 0
    %2463 = vmatprep.subr.bf16.mxu0 0
    %2464 = vmatpush2.bf16.msra.mxu0 0
    %2465 = vmatprep.subr.bf16.mxu0 0
    %2466 = vmatpush2.bf16.msra.mxu0 0
    %2467 = vmatprep.subr.bf16.mxu0 0
    %2468 = vmatpush2.bf16.msra.mxu0 0
    %2469 = vmatprep.subr.bf16.mxu0 0
    %2470 = vmatpush2.bf16.msra.mxu0 0
    %2471 = vmatprep.subr.bf16.mxu0 0
    %2472 = vmatpush2.bf16.msra.mxu0 0
    %2473 = vmatprep.subr.bf16.mxu0 0
    %2474 = vmatpush2.bf16.msra.mxu0 0
    %2475 = vmatprep.mubr.bf16.mxu0 0
    %2476 = vmatmul.mubr.bf16.gmra.mxu0 %v2378
    %v2477 = vpop.f32.mrf.mxu0
    %v2478 = vadd.f32 %v106, %v2477
    %v2479 = vpop.f32.mrf.mxu0
    %v2480 = vpop.f32.mrf.mxu0
    %v2481 = vpop.f32.mrf.mxu0
    %2482 = vdwg.mxu0
    %v2483 = vadd.f32 %v2478, %v1889
    %s2484 = scalar_lea.vmem [#allocation10], 24
    %2485 = vst [vmem:[%s2484] sm:$0xff] %v2483
    %2486 = vst [vmem:[#allocation11] sm:$0xff] %v2377
    // Predicated region
    $region42: #{tpu_custom_call.1} parent=1 // pred_check
      _
    $region43: #{tpu_custom_call.1} parent=1 // pred_check_branch
      %2488 = sbr.rel (0) target = $region45
    $region44: #{tpu_custom_call.1} parent=1 // pred_region
      %s2490 = ssub.s32 512, 512
      %2491 = vsyncadd [#allocation4], %s2490
      %s2492 = sshll.u32 [#allocation10], 4
      %s2493 = int_to_ptr.vmem [resolvable:$true] %s2492
      %2498 = dma.vmem_to_hbm [thread:$0]  %s2493, 512, %s6, [#allocation4], 128, 128, 8
    $region45: #{tpu_custom_call.1} parent=1 // pred_fallthru
      _
    // Predicated region
    $region46: #{tpu_custom_call.1} parent=1 // pred_check
      _
    $region47: #{tpu_custom_call.1} parent=1 // pred_check_branch
      %2500 = sbr.rel (0) target = $region49
    $region48: #{tpu_custom_call.1} parent=1 // pred_region
      %s2502 = ssub.s32 128, 128
      %2503 = vsyncadd [#allocation12], %s2502
      %s2505 = sshll.u32 [#allocation11], 4
      %s2506 = int_to_ptr.vmem [resolvable:$true] %s2505
      %2508 = dma.vmem_to_hbm [thread:$0]  %s2506, 128, %s7, [#allocation12]
    $region49: #{tpu_custom_call.1} parent=1 // pred_fallthru
      _
    // Predicated region
    $region50: #{tpu_custom_call.1} parent=1 // pred_check
      _
    $region51: #{tpu_custom_call.1} parent=1 // pred_check_branch
      %2510 = sbr.rel (0) target = $region53
    $region52: #{tpu_custom_call.1} parent=1 // pred_region
      %2511 = dma.done [#allocation4], 512
    $region53: #{tpu_custom_call.1} parent=1 // pred_fallthru
      _
    // Predicated region
    $region54: #{tpu_custom_call.1} parent=1 // pred_check
      _
    $region55: #{tpu_custom_call.1} parent=1 // pred_check_branch
      %2513 = sbr.rel (0) target = $region57
    $region56: #{tpu_custom_call.1} parent=1 // pred_region
      %2514 = dma.done [#allocation12], 128
    $region57: #{tpu_custom_call.1} parent=1 // pred_fallthru
      _
    %2515 = vsyncpa [#allocation3], 1
    %2516 = vsyncpa [#allocation6], 1
    %2517 = vsyncpa [#allocation9], 1
    %2518 = vsyncpa [#allocation4], 1
    %2519 = vsyncpa [#allocation12], 1

</llo_original>
